<compile_context>
chip_gen: v7x
topology: tpu7x:2x2x1
jax: 0.10.0
libtpu: 0.0.40
codegen_flags: <defaults>
</compile_context>

<pallas_src>
import functools
import math

import jax
import jax.numpy as jnp
from jax.experimental import pallas as pl
from jax.experimental.pallas import tpu as pltpu


def _encoder_kernel(x_ref, s0_ref, cq_ref, row_ref, ev_ref, w0v_ref,
                    gamma_ref, beta_ref, enc_ref, attn_ref, attn_sum_ref,
                    *, num_layers, tile_n, seq_len, d_model, eps):
    """Grid = (B, N // tile_n, num_layers); layer is the innermost axis.

    x_ref   : (1, TN, L)      raw series (x-channel of embed_x)
    s0_ref  : (1, 1, L, L)    Eq @ Ek^T                (pre-scaled by 1/sqrt(D))
    cq_ref  : (1, 1, L, 1)    Eq @ w0k  (column form)  (pre-scaled)
    row_ref : (1, 1, 2, L)    rows = [Ek @ w0q, alpha] (pre-scaled)
    ev_ref  : (1, 1, L, D)    emb @ Wv[1:, :]
    w0v_ref : (1, 1, D)       Wv[0, :]
    """
    layer = pl.program_id(2)

    x = x_ref[0]                       # (TN, L)
    s0 = s0_ref[0, 0]                  # (L, L)
    cq = cq_ref[0, 0]                  # (L, 1)
    ck = row_ref[0, 0, 0]              # (L,)
    al = row_ref[0, 0, 1]              # (L,)   alpha broadcast along L

    xl = x[:, :, None]                 # (TN, L, 1)  x_n on the sublane axis
    xm = x[:, None, :]                 # (TN, 1, L)  x_n on the lane axis

    # scores_n = S0 + outer(cq, x_n) + outer(x_n, ck + alpha * x_n)  (pure VPU)
    s = (s0[None, :, :]
         + cq[None, :, :] * xm
         + xl * (ck[None, None, :] + al[None, None, :] * xm))

    s = s - jnp.max(s, axis=-1, keepdims=True)
    p = jnp.exp(s)
    denom = jnp.sum(p, axis=-1, keepdims=True)
    # approx=True would push the divide onto the otherwise-idle EUP; kept exact
    # here so the tiny-shape correctness check has plenty of headroom.
    attn = p * pl.reciprocal(denom, approx=False)

    @pl.when(layer == 0)
    def _():
        attn_sum_ref[...] = jnp.zeros_like(attn_sum_ref)

    attn_sum_ref[...] += attn

    @pl.when(layer == num_layers - 1)
    def _():
        # enc is the LAST layer's output (every layer consumes embed_x), so the
        # attn @ v contraction + LayerNorm only run on the final layer step.
        ev = ev_ref[0, 0]              # (L, D)
        w0v = w0v_ref[0, 0]            # (D,)
        out = jnp.dot(attn.reshape(tile_n * seq_len, seq_len), ev,
                      preferred_element_type=jnp.float32)
        out = out.reshape(tile_n, seq_len, d_model)
        ax = jnp.sum(attn * xm, axis=-1)                 # (TN, L) = attn_n @ x_n
        out = out + ax[:, :, None] * w0v[None, None, :]

        # norm_layer = LayerNorm over the feature dim.
        mu = jnp.mean(out, axis=-1, keepdims=True)
        var = jnp.mean((out - mu) ** 2, axis=-1, keepdims=True)
        normed = (out - mu) * jax.lax.rsqrt(var + eps)
        normed = normed * gamma_ref[0][None, None, :] + beta_ref[0][None, None, :]

        # Lane-dense slab stores: last dims L*D and L*L instead of D / L.
        enc_ref[0] = normed.reshape(tile_n, seq_len * d_model).astype(enc_ref.dtype)
        attn_ref[0] = (attn_sum_ref[...] * (1.0 / num_layers)).reshape(
            tile_n, seq_len * seq_len).astype(attn_ref.dtype)


def _vmem_estimate(tn, seq_len, d_model):
    """Rough per-step VMEM bytes: double-buffered in/out blocks + scratch +
    live intermediates (scores/attn/out)."""
    in_blk = (tn * seq_len                     # x tile
              + seq_len * seq_len              # S0
              + seq_len                        # cq
              + 2 * seq_len                    # ck, alpha
              + seq_len * d_model              # Ev
              + d_model                        # w0v
              + 2 * d_model)                   # gamma, beta
    out_blk = tn * seq_len * (d_model + seq_len)
    scratch = tn * seq_len * seq_len
    live = tn * seq_len * (3 * seq_len + 3 * d_model)
    return 4 * (2 * (in_blk + out_blk) + scratch + live)


def _pick_tile_n(n, b, seq_len, d_model, vmem_budget_bytes):
    """Largest legal divisor of n fitting the VMEM budget; tile_n must be n or a
    multiple of 8 (block sublane rule), and we prefer >= 2 total parallel grid
    steps so both v7x TensorCores get work."""
    legal = [tn for tn in range(1, n + 1)
             if n % tn == 0 and (tn == n or tn % 8 == 0)]
    fits = [tn for tn in legal if _vmem_estimate(tn, seq_len, d_model) <= vmem_budget_bytes]
    if not fits:
        return min(legal)
    par = [tn for tn in fits if b * (n // tn) >= 2]
    return max(par) if par else max(fits)


def encoder_forward(x, x_mark, params, *, tile_n=None, vmem_budget_bytes=12 << 20):
    """JAX/Pallas equivalent of Encoder.forward (enc_layers=None branch).

    x:      (B, N, L, 1)   float32
    x_mark: (B, 1, L, M)   float32
    returns (enc_x, attns) with shapes (B, N, L, 1+H) and (B, N, L, L).
    """
    B, N, L, _ = x.shape

    # torch.flip(..., dims=[2])
    x = jnp.flip(x, axis=2).astype(jnp.float32)
    x_mark = jnp.flip(x_mark, axis=2).astype(jnp.float32)

    # TODO(synk): `target` and `pearson_sparse_matrix` are forwarded to the
    # injected attn_layers in the original code; the concrete synthetic
    # attention layer instantiated here does not consume them.
    _target = jnp.squeeze(x, axis=-1)

    wq, wk, wv = params["wq"], params["wk"], params["wv"]      # (NL, D, D)
    num_layers, D, _ = wq.shape
    scale = 1.0 / math.sqrt(D)

    # embed(x_mark) is shared across the N axis ("repeat" in the PyTorch code),
    # so all n-independent pieces of the projections / score matrix are hoisted
    # here once per (b, layer) instead of being rebuilt per n in the kernel.
    emb = jnp.einsum("blm,mh->blh", x_mark[:, 0], params["w_embed"]) + params["b_embed"]

    w0q, w0k, w0v = wq[:, 0, :], wk[:, 0, :], wv[:, 0, :]      # (NL, D)
    eq = jnp.einsum("blh,nhd->bnld", emb, wq[:, 1:, :])        # (B, NL, L, D)
    ek = jnp.einsum("blh,nhd->bnld", emb, wk[:, 1:, :])
    ev = jnp.einsum("blh,nhd->bnld", emb, wv[:, 1:, :])

    # embed_x @ W == outer(x, W[0,:]) + emb @ W[1:,:]  (exact reassociation).
    # Per-n scores are rank-1 updates of these shared pieces, all pre-scaled.
    s0 = jnp.einsum("bnld,bnmd->bnlm", eq, ek) * scale                 # (B,NL,L,L)
    cq = (jnp.einsum("bnld,nd->bnl", eq, w0k) * scale)[..., None]      # (B,NL,L,1)
    ck = jnp.einsum("bnld,nd->bnl", ek, w0q) * scale                   # (B,NL,L)
    alpha = jnp.sum(w0q * w0k, axis=-1) * scale                        # (NL,)
    al = jnp.broadcast_to(alpha[None, :, None], (B, num_layers, L))
    row = jnp.stack([ck, al], axis=2)                                  # (B,NL,2,L)
    w0v_in = w0v[:, None, :]                                           # (NL,1,D)

    x_sq = x[..., 0]                                                   # (B, N, L)

    if tile_n is None:
        tile_n = _pick_tile_n(N, B, L, D, vmem_budget_bytes)
    assert N % tile_n == 0, "tile_n must divide N"
    assert tile_n == N or tile_n % 8 == 0, "tile_n must be N or a multiple of 8"
    grid = (B, N // tile_n, num_layers)

    kernel = functools.partial(
        _encoder_kernel, num_layers=num_layers, tile_n=tile_n,
        seq_len=L, d_model=D, eps=1e-5)

    # Advisory cost estimate for XLA's scheduler.
    flops = (B * N * num_layers * 10 * L * L
             + B * N * (2 * L * L * D + 12 * L * D))
    transcendentals = B * N * num_layers * L * L
    bytes_accessed = 4 * (x_sq.size + s0.size + cq.size + row.size + ev.size
                          + w0v_in.size + 2 * D
                          + B * N * L * D + B * N * L * L)

    vmem_est = _vmem_estimate(tile_n, L, D)
    compiler_kwargs = dict(
        dimension_semantics=("parallel", "parallel", "arbitrary"))
    if vmem_est > (14 << 20):
        # Scoped-VMEM defaults: 16 MiB (v5e) / 32 MiB (v6e, v7x); stay below
        # v7x's 64 MiB physical VMEM.
        compiler_kwargs["vmem_limit_bytes"] = int(min(vmem_est + (4 << 20), 60 << 20))

    enc_flat, attn_flat = pl.pallas_call(
        kernel,
        out_shape=(
            jax.ShapeDtypeStruct((B, N, L * D), jnp.float32),
            jax.ShapeDtypeStruct((B, N, L * L), jnp.float32),
        ),
        grid_spec=pltpu.PrefetchScalarGridSpec(
            num_scalar_prefetch=0,
            grid=grid,
            in_specs=[
                pl.BlockSpec((1, tile_n, L), lambda b, j, l: (b, j, 0)),
                pl.BlockSpec((1, 1, L, L), lambda b, j, l: (b, l, 0, 0)),
                pl.BlockSpec((1, 1, L, 1), lambda b, j, l: (b, l, 0, 0)),
                pl.BlockSpec((1, 1, 2, L), lambda b, j, l: (b, l, 0, 0)),
                pl.BlockSpec((1, 1, L, D), lambda b, j, l: (b, l, 0, 0)),
                pl.BlockSpec((1, 1, D), lambda b, j, l: (l, 0, 0)),
                pl.BlockSpec((1, D), lambda b, j, l: (0, 0)),
                pl.BlockSpec((1, D), lambda b, j, l: (0, 0)),
            ],
            out_specs=(
                pl.BlockSpec((1, tile_n, L * D), lambda b, j, l: (b, j, 0)),
                pl.BlockSpec((1, tile_n, L * L), lambda b, j, l: (b, j, 0)),
            ),
            scratch_shapes=[pltpu.VMEM((tile_n, L, L), jnp.float32)],
        ),
        compiler_params=pltpu.CompilerParams(**compiler_kwargs),
        cost_estimate=pl.CostEstimate(
            flops=int(flops),
            transcendentals=int(transcendentals),
            bytes_accessed=int(bytes_accessed)),
    )(x_sq, s0, cq, row, ev, w0v_in, params["gamma"], params["beta"])

    enc = enc_flat.reshape(B, N, L, D)
    attns = attn_flat.reshape(B, N, L, L)
    return enc, attns


def _reference_forward(x, x_mark, params):
    """Pure-JAX reference of the same forward pass, for a correctness check."""
    B, N, L, _ = x.shape
    x = jnp.flip(x, axis=2)
    x_mark = jnp.flip(x_mark, axis=2)
    emb = jnp.einsum("bnlm,mh->bnlh", x_mark, params["w_embed"]) + params["b_embed"]
    emb = jnp.tile(emb, (1, N, 1, 1))
    embed_x = jnp.concatenate([x, emb], axis=-1)
    D = embed_x.shape[-1]
    num_layers = params["wq"].shape[0]
    scale = 1.0 / math.sqrt(D)

    attn_list = []
    enc = None
    for layer in range(num_layers):
        q = jnp.einsum("bnld,de->bnle", embed_x, params["wq"][layer])
        k = jnp.einsum("bnld,de->bnle", embed_x, params["wk"][layer])
        v = jnp.einsum("bnld,de->bnle", embed_x, params["wv"][layer])
        s = jnp.einsum("bnle,bnme->bnlm", q, k) * scale
        attn = jax.nn.softmax(s, axis=-1)
        enc = jnp.einsum("bnlm,bnmd->bnld", attn, v)
        attn_list.append(attn)
    attns = jnp.mean(jnp.stack(attn_list), axis=0)

    mu = jnp.mean(enc, axis=-1, keepdims=True)
    var = jnp.mean((enc - mu) ** 2, axis=-1, keepdims=True)
    enc = (enc - mu) * jax.lax.rsqrt(var + 1e-5)
    enc = enc * params["gamma"][0] + params["beta"][0]
    return enc, attns


if __name__ == "__main__":
    key = jax.random.PRNGKey(0)
    B, N, L, M, H = 2, 4, 8, 4, 31          # small shapes; D = 1 + H = 32
    NUM_LAYERS = 2
    D = 1 + H

    ks = jax.random.split(key, 8)
    x = jax.random.normal(ks[0], (B, N, L, 1), jnp.float32)
    x_mark = jax.random.normal(ks[1], (B, 1, L, M), jnp.float32)

    params = {
        "w_embed": 0.1 * jax.random.normal(ks[2], (M, H), jnp.float32),
        "b_embed": jnp.zeros((H,), jnp.float32),
        "wq": jax.random.normal(ks[3], (NUM_LAYERS, D, D), jnp.float32) / jnp.sqrt(D),
        "wk": jax.random.normal(ks[4], (NUM_LAYERS, D, D), jnp.float32) / jnp.sqrt(D),
        "wv": jax.random.normal(ks[5], (NUM_LAYERS, D, D), jnp.float32) / jnp.sqrt(D),
        "gamma": jnp.ones((1, D), jnp.float32),
        "beta": jnp.zeros((1, D), jnp.float32),
    }

    enc, attns = encoder_forward(x, x_mark, params)
    (enc, attns) = jax.block_until_ready((enc, attns))

    enc_ref, attns_ref = _reference_forward(x, x_mark, params)
    assert enc.shape == (B, N, L, D) and attns.shape == (B, N, L, L)
    assert jnp.allclose(enc, enc_ref, rtol=1e-3, atol=1e-3)
    assert jnp.allclose(attns, attns_ref, rtol=1e-3, atol=1e-3)

    print("KERNEL_OK")
</pallas_src>

<mosaic_0001>
module attributes {stable_mosaic.version = 11 : i64} {
  func.func @_encoder_kernel(%arg0: i32, %arg1: i32, %arg2: i32, %arg3: memref<1x4x8xf32, #tpu.memory_space<vmem>>, %arg4: memref<1x1x8x8xf32, #tpu.memory_space<vmem>>, %arg5: memref<1x1x8x1xf32, #tpu.memory_space<vmem>>, %arg6: memref<1x1x2x8xf32, #tpu.memory_space<vmem>>, %arg7: memref<1x1x8x32xf32, #tpu.memory_space<vmem>>, %arg8: memref<1x1x32xf32, #tpu.memory_space<vmem>>, %arg9: memref<1x32xf32, #tpu.memory_space<vmem>>, %arg10: memref<1x32xf32, #tpu.memory_space<vmem>>, %arg11: memref<1x4x256xf32, #tpu.memory_space<vmem>>, %arg12: memref<1x4x64xf32, #tpu.memory_space<vmem>>, %arg13: memref<4x8x8xf32, #tpu.memory_space<vmem>>) attributes {dimension_semantics = [#tpu.dimension_semantics<parallel>, #tpu.dimension_semantics<parallel>, #tpu.dimension_semantics<arbitrary>], iteration_bounds = array<i64: 2, 1, 2>, scalar_prefetch = 0 : i64, scratch_operands = 1 : i64, tpu.core_type = #tpu.core_type<tc>, window_params = [{transform_indices = @transform_0, window_bounds = array<i64: 1, 4, 8>}, {transform_indices = @transform_1, window_bounds = array<i64: 1, 1, 8, 8>}, {transform_indices = @transform_2, window_bounds = array<i64: 1, 1, 8, 1>}, {transform_indices = @transform_3, window_bounds = array<i64: 1, 1, 2, 8>}, {transform_indices = @transform_4, window_bounds = array<i64: 1, 1, 8, 32>}, {transform_indices = @transform_5, window_bounds = array<i64: 1, 1, 32>}, {pipeline_mode = #tpu.pipeline_mode<synchronous>, transform_indices = @transform_6, window_bounds = array<i64: 1, 32>}, {pipeline_mode = #tpu.pipeline_mode<synchronous>, transform_indices = @transform_7, window_bounds = array<i64: 1, 32>}, {transform_indices = @transform_8, window_bounds = array<i64: 1, 4, 256>}, {transform_indices = @transform_9, window_bounds = array<i64: 1, 4, 64>}]} {
    %c0 = arith.constant 0 : index
    %c0_0 = arith.constant 0 : index
    %c0_1 = arith.constant 0 : index
    %0 = vector.load %arg3[%c0, %c0_0, %c0_1] : memref<1x4x8xf32, #tpu.memory_space<vmem>>, vector<1x4x8xf32>
    %1 = vector.shape_cast %0 : vector<1x4x8xf32> to vector<4x8xf32>
    %c0_2 = arith.constant 0 : index
    %c0_3 = arith.constant 0 : index
    %c0_4 = arith.constant 0 : index
    %c0_5 = arith.constant 0 : index
    %2 = vector.load %arg4[%c0_2, %c0_3, %c0_4, %c0_5] : memref<1x1x8x8xf32, #tpu.memory_space<vmem>>, vector<1x1x8x8xf32>
    %3 = vector.shape_cast %2 : vector<1x1x8x8xf32> to vector<8x8xf32>
    %c0_6 = arith.constant 0 : index
    %c0_7 = arith.constant 0 : index
    %c0_8 = arith.constant 0 : index
    %c0_9 = arith.constant 0 : index
    %4 = vector.load %arg5[%c0_6, %c0_7, %c0_8, %c0_9] : memref<1x1x8x1xf32, #tpu.memory_space<vmem>>, vector<1x1x8x1xf32>
    %5 = vector.shape_cast %4 : vector<1x1x8x1xf32> to vector<8x1xf32>
    %c0_10 = arith.constant 0 : index
    %c0_11 = arith.constant 0 : index
    %c0_12 = arith.constant 0 : index
    %c0_13 = arith.constant 0 : index
    %6 = vector.load %arg6[%c0_10, %c0_11, %c0_12, %c0_13] : memref<1x1x2x8xf32, #tpu.memory_space<vmem>>, vector<1x1x1x8xf32>
    %7 = vector.shape_cast %6 : vector<1x1x1x8xf32> to vector<8xf32>
    %c0_14 = arith.constant 0 : index
    %c0_15 = arith.constant 0 : index
    %c1 = arith.constant 1 : index
    %c0_16 = arith.constant 0 : index
    %8 = vector.load %arg6[%c0_14, %c0_15, %c1, %c0_16] : memref<1x1x2x8xf32, #tpu.memory_space<vmem>>, vector<1x1x1x8xf32>
    %9 = vector.shape_cast %8 : vector<1x1x1x8xf32> to vector<8xf32>
    %10 = vector.shape_cast %1 : vector<4x8xf32> to vector<4x8x1xf32>
    %11 = vector.shape_cast %1 : vector<4x8xf32> to vector<4x1x8xf32>
    %12 = vector.shape_cast %3 : vector<8x8xf32> to vector<1x8x8xf32>
    %13 = vector.shape_cast %5 : vector<8x1xf32> to vector<1x8x1xf32>
    %14 = vector.broadcast %13 : vector<1x8x1xf32> to vector<4x8x8xf32>
    %15 = vector.broadcast %11 : vector<4x1x8xf32> to vector<4x8x8xf32>
    %16 = arith.mulf %14, %15 : vector<4x8x8xf32>
    %17 = vector.broadcast %12 : vector<1x8x8xf32> to vector<4x8x8xf32>
    %18 = arith.addf %17, %16 : vector<4x8x8xf32>
    %19 = vector.shape_cast %7 : vector<8xf32> to vector<1x1x8xf32>
    %20 = vector.shape_cast %9 : vector<8xf32> to vector<1x1x8xf32>
    %21 = vector.broadcast %20 : vector<1x1x8xf32> to vector<4x1x8xf32>
    %22 = arith.mulf %21, %11 : vector<4x1x8xf32>
    %23 = vector.broadcast %19 : vector<1x1x8xf32> to vector<4x1x8xf32>
    %24 = arith.addf %23, %22 : vector<4x1x8xf32>
    %25 = vector.broadcast %10 : vector<4x8x1xf32> to vector<4x8x8xf32>
    %26 = vector.broadcast %24 : vector<4x1x8xf32> to vector<4x8x8xf32>
    %27 = arith.mulf %25, %26 : vector<4x8x8xf32>
    %28 = arith.addf %18, %27 : vector<4x8x8xf32>
    %cst = arith.constant dense<0xFF800000> : vector<4x8xf32>
    %29 = vector.multi_reduction <maximumf>, %28, %cst [2] : vector<4x8x8xf32> to vector<4x8xf32>
    %30 = vector.shape_cast %29 : vector<4x8xf32> to vector<4x8x1xf32>
    %31 = vector.broadcast %30 : vector<4x8x1xf32> to vector<4x8x8xf32>
    %32 = arith.subf %28, %31 : vector<4x8x8xf32>
    %33 = math.exp %32 : vector<4x8x8xf32>
    %cst_17 = arith.constant dense<0.000000e+00> : vector<4x8xf32>
    %34 = vector.multi_reduction <add>, %33, %cst_17 [2] : vector<4x8x8xf32> to vector<4x8xf32>
    %35 = vector.shape_cast %34 : vector<4x8xf32> to vector<4x8x1xf32>
    %36 = tpu.reciprocal %35 : vector<4x8x1xf32> -> vector<4x8x1xf32>
    %37 = vector.broadcast %36 : vector<4x8x1xf32> to vector<4x8x8xf32>
    %38 = arith.mulf %33, %37 : vector<4x8x8xf32>
    %c0_i32 = arith.constant 0 : i32
    %39 = arith.cmpi eq, %arg2, %c0_i32 : i32
    %40 = arith.extui %39 : i1 to i32
    %c0_i32_18 = arith.constant 0 : i32
    %41 = arith.cmpi ne, %40, %c0_i32_18 : i32
    scf.if %41 {
      %cst_26 = arith.constant 0.000000e+00 : f32
      %48 = vector.broadcast %cst_26 : f32 to vector<4x8x8xf32>
      %c0_27 = arith.constant 0 : index
      %c0_28 = arith.constant 0 : index
      %c0_29 = arith.constant 0 : index
      %49 = vector.load %arg13[%c0_27, %c0_28, %c0_29] : memref<4x8x8xf32, #tpu.memory_space<vmem>>, vector<4x8x8xf32>
      tpu.vector_store %arg13[%c0_27, %c0_28, %c0_29], %48 {strides = array<i32>} : memref<4x8x8xf32, #tpu.memory_space<vmem>>, vector<4x8x8xf32>,
    } else {
    }
    %c0_19 = arith.constant 0 : index
    %c0_20 = arith.constant 0 : index
    %c0_21 = arith.constant 0 : index
    %42 = vector.load %arg13[%c0_19, %c0_20, %c0_21] : memref<4x8x8xf32, #tpu.memory_space<vmem>>, vector<4x8x8xf32>
    %43 = arith.addf %42, %38 : vector<4x8x8xf32>
    %c0_22 = arith.constant 0 : index
    %c0_23 = arith.constant 0 : index
    %c0_24 = arith.constant 0 : index
    %44 = vector.load %arg13[%c0_22, %c0_23, %c0_24] : memref<4x8x8xf32, #tpu.memory_space<vmem>>, vector<4x8x8xf32>
    tpu.vector_store %arg13[%c0_22, %c0_23, %c0_24], %43 {strides = array<i32>} : memref<4x8x8xf32, #tpu.memory_space<vmem>>, vector<4x8x8xf32>,
    %c1_i32 = arith.constant 1 : i32
    %45 = arith.cmpi eq, %arg2, %c1_i32 : i32
    %46 = arith.extui %45 : i1 to i32
    %c0_i32_25 = arith.constant 0 : i32
    %47 = arith.cmpi ne, %46, %c0_i32_25 : i32
    scf.if %47 {
      %c0_26 = arith.constant 0 : index
      %c0_27 = arith.constant 0 : index
      %c0_28 = arith.constant 0 : index
      %c0_29 = arith.constant 0 : index
      %48 = vector.load %arg7[%c0_26, %c0_27, %c0_28, %c0_29] : memref<1x1x8x32xf32, #tpu.memory_space<vmem>>, vector<1x1x8x32xf32>
      %49 = vector.shape_cast %48 : vector<1x1x8x32xf32> to vector<8x32xf32>
      %c0_30 = arith.constant 0 : index
      %c0_31 = arith.constant 0 : index
      %c0_32 = arith.constant 0 : index
      %50 = vector.load %arg8[%c0_30, %c0_31, %c0_32] : memref<1x1x32xf32, #tpu.memory_space<vmem>>, vector<1x1x32xf32>
      %51 = vector.shape_cast %50 : vector<1x1x32xf32> to vector<32xf32>
      %52 = vector.shape_cast %38 : vector<4x8x8xf32> to vector<32x8xf32>
      %cst_33 = arith.constant dense<0.000000e+00> : vector<32x32xf32>
      %53 = tpu.matmul %52, %49, %cst_33 {dimension_numbers = #tpu.dot_dimension_numbers<[1], [0], [0], [1], [0, 0, 1, 1], [], []>} : vector<32x8xf32>, vector<8x32xf32>, vector<32x32xf32> -> vector<32x32xf32>
      %54 = vector.shape_cast %53 : vector<32x32xf32> to vector<4x8x32xf32>
      %55 = vector.broadcast %11 : vector<4x1x8xf32> to vector<4x8x8xf32>
      %56 = arith.mulf %38, %55 : vector<4x8x8xf32>
      %cst_34 = arith.constant dense<0.000000e+00> : vector<4x8xf32>
      %57 = vector.multi_reduction <add>, %56, %cst_34 [2] : vector<4x8x8xf32> to vector<4x8xf32>
      %58 = vector.shape_cast %57 : vector<4x8xf32> to vector<4x8x1xf32>
      %59 = vector.shape_cast %51 : vector<32xf32> to vector<1x1x32xf32>
      %60 = vector.broadcast %58 : vector<4x8x1xf32> to vector<4x8x32xf32>
      %61 = vector.broadcast %59 : vector<1x1x32xf32> to vector<4x8x32xf32>
      %62 = arith.mulf %60, %61 : vector<4x8x32xf32>
      %63 = arith.addf %54, %62 : vector<4x8x32xf32>
      %cst_35 = arith.constant dense<0.000000e+00> : vector<4x8xf32>
      %64 = vector.multi_reduction <add>, %63, %cst_35 [2] : vector<4x8x32xf32> to vector<4x8xf32>
      %65 = vector.shape_cast %64 : vector<4x8xf32> to vector<4x8x1xf32>
      %cst_36 = arith.constant 3.200000e+01 : f32
      %66 = vector.broadcast %cst_36 : f32 to vector<4x8x1xf32>
      %67 = arith.divf %65, %66 : vector<4x8x1xf32>
      %68 = vector.broadcast %67 : vector<4x8x1xf32> to vector<4x8x32xf32>
      %69 = arith.subf %63, %68 : vector<4x8x32xf32>
      %70 = arith.mulf %69, %69 : vector<4x8x32xf32>
      %cst_37 = arith.constant dense<0.000000e+00> : vector<4x8xf32>
      %71 = vector.multi_reduction <add>, %70, %cst_37 [2] : vector<4x8x32xf32> to vector<4x8xf32>
      %72 = vector.shape_cast %71 : vector<4x8xf32> to vector<4x8x1xf32>
      %cst_38 = arith.constant 3.200000e+01 : f32
      %73 = vector.broadcast %cst_38 : f32 to vector<4x8x1xf32>
      %74 = arith.divf %72, %73 : vector<4x8x1xf32>
      %75 = vector.broadcast %67 : vector<4x8x1xf32> to vector<4x8x32xf32>
      %76 = arith.subf %63, %75 : vector<4x8x32xf32>
      %cst_39 = arith.constant 9.99999974E-6 : f32
      %77 = vector.broadcast %cst_39 : f32 to vector<4x8x1xf32>
      %78 = arith.addf %74, %77 : vector<4x8x1xf32>
      %79 = math.rsqrt %78 : vector<4x8x1xf32>
      %80 = vector.broadcast %79 : vector<4x8x1xf32> to vector<4x8x32xf32>
      %81 = arith.mulf %76, %80 : vector<4x8x32xf32>
      %c0_40 = arith.constant 0 : index
      %c0_41 = arith.constant 0 : index
      %82 = vector.load %arg9[%c0_40, %c0_41] : memref<1x32xf32, #tpu.memory_space<vmem>>, vector<1x32xf32>
      %83 = vector.shape_cast %82 : vector<1x32xf32> to vector<32xf32>
      %84 = vector.shape_cast %83 : vector<32xf32> to vector<1x1x32xf32>
      %85 = vector.broadcast %84 : vector<1x1x32xf32> to vector<4x8x32xf32>
      %86 = arith.mulf %81, %85 : vector<4x8x32xf32>
      %c0_42 = arith.constant 0 : index
      %c0_43 = arith.constant 0 : index
      %87 = vector.load %arg10[%c0_42, %c0_43] : memref<1x32xf32, #tpu.memory_space<vmem>>, vector<1x32xf32>
      %88 = vector.shape_cast %87 : vector<1x32xf32> to vector<32xf32>
      %89 = vector.shape_cast %88 : vector<32xf32> to vector<1x1x32xf32>
      %90 = vector.broadcast %89 : vector<1x1x32xf32> to vector<4x8x32xf32>
      %91 = arith.addf %86, %90 : vector<4x8x32xf32>
      %92 = vector.shape_cast %91 : vector<4x8x32xf32> to vector<4x256xf32>
      %c0_44 = arith.constant 0 : index
      %c0_45 = arith.constant 0 : index
      %c0_46 = arith.constant 0 : index
      %93 = vector.load %arg11[%c0_44, %c0_45, %c0_46] : memref<1x4x256xf32, #tpu.memory_space<vmem>>, vector<1x4x256xf32>
      %94 = vector.shape_cast %93 : vector<1x4x256xf32> to vector<4x256xf32>
      %95 = vector.shape_cast %92 : vector<4x256xf32> to vector<1x4x256xf32>
      tpu.vector_store %arg11[%c0_44, %c0_45, %c0_46], %95 {strides = array<i32>} : memref<1x4x256xf32, #tpu.memory_space<vmem>>, vector<1x4x256xf32>,
      %c0_47 = arith.constant 0 : index
      %c0_48 = arith.constant 0 : index
      %c0_49 = arith.constant 0 : index
      %96 = vector.load %arg13[%c0_47, %c0_48, %c0_49] : memref<4x8x8xf32, #tpu.memory_space<vmem>>, vector<4x8x8xf32>
      %cst_50 = arith.constant 5.000000e-01 : f32
      %97 = vector.broadcast %cst_50 : f32 to vector<4x8x8xf32>
      %98 = arith.mulf %96, %97 : vector<4x8x8xf32>
      %99 = vector.shape_cast %98 : vector<4x8x8xf32> to vector<4x64xf32>
      %c0_51 = arith.constant 0 : index
      %c0_52 = arith.constant 0 : index
      %c0_53 = arith.constant 0 : index
      %100 = vector.load %arg12[%c0_51, %c0_52, %c0_53] : memref<1x4x64xf32, #tpu.memory_space<vmem>>, vector<1x4x64xf32>
      %101 = vector.shape_cast %100 : vector<1x4x64xf32> to vector<4x64xf32>
      %102 = vector.shape_cast %99 : vector<4x64xf32> to vector<1x4x64xf32>
      tpu.vector_store %arg12[%c0_51, %c0_52, %c0_53], %102 {strides = array<i32>} : memref<1x4x64xf32, #tpu.memory_space<vmem>>, vector<1x4x64xf32>,
    } else {
    }
    return
  }
  func.func @transform_0(%arg0: i32, %arg1: i32, %arg2: i32) -> (i32, i32, i32) {
    %c0_i32 = arith.constant 0 : i32
    %c0_i32_0 = arith.constant 0 : i32
    return %arg0, %arg1, %c0_i32 : i32, i32, i32
  }
  func.func @transform_1(%arg0: i32, %arg1: i32, %arg2: i32) -> (i32, i32, i32, i32) {
    %c0_i32 = arith.constant 0 : i32
    %c0_i32_0 = arith.constant 0 : i32
    %c0_i32_1 = arith.constant 0 : i32
    return %arg0, %arg2, %c0_i32, %c0_i32_0 : i32, i32, i32, i32
  }
  func.func @transform_2(%arg0: i32, %arg1: i32, %arg2: i32) -> (i32, i32, i32, i32) {
    %c0_i32 = arith.constant 0 : i32
    %c0_i32_0 = arith.constant 0 : i32
    %c0_i32_1 = arith.constant 0 : i32
    return %arg0, %arg2, %c0_i32, %c0_i32_0 : i32, i32, i32, i32
  }
  func.func @transform_3(%arg0: i32, %arg1: i32, %arg2: i32) -> (i32, i32, i32, i32) {
    %c0_i32 = arith.constant 0 : i32
    %c0_i32_0 = arith.constant 0 : i32
    %c0_i32_1 = arith.constant 0 : i32
    return %arg0, %arg2, %c0_i32, %c0_i32_0 : i32, i32, i32, i32
  }
  func.func @transform_4(%arg0: i32, %arg1: i32, %arg2: i32) -> (i32, i32, i32, i32) {
    %c0_i32 = arith.constant 0 : i32
    %c0_i32_0 = arith.constant 0 : i32
    %c0_i32_1 = arith.constant 0 : i32
    return %arg0, %arg2, %c0_i32, %c0_i32_0 : i32, i32, i32, i32
  }
  func.func @transform_5(%arg0: i32, %arg1: i32, %arg2: i32) -> (i32, i32, i32) {
    %c0_i32 = arith.constant 0 : i32
    %c0_i32_0 = arith.constant 0 : i32
    %c0_i32_1 = arith.constant 0 : i32
    return %arg2, %c0_i32, %c0_i32_0 : i32, i32, i32
  }
  func.func @transform_6(%arg0: i32, %arg1: i32, %arg2: i32) -> (i32, i32) {
    %c0_i32 = arith.constant 0 : i32
    %c0_i32_0 = arith.constant 0 : i32
    %c0_i32_1 = arith.constant 0 : i32
    return %c0_i32, %c0_i32_0 : i32, i32
  }
  func.func @transform_7(%arg0: i32, %arg1: i32, %arg2: i32) -> (i32, i32) {
    %c0_i32 = arith.constant 0 : i32
    %c0_i32_0 = arith.constant 0 : i32
    %c0_i32_1 = arith.constant 0 : i32
    return %c0_i32, %c0_i32_0 : i32, i32
  }
  func.func @transform_8(%arg0: i32, %arg1: i32, %arg2: i32) -> (i32, i32, i32) {
    %c0_i32 = arith.constant 0 : i32
    %c0_i32_0 = arith.constant 0 : i32
    return %arg0, %arg1, %c0_i32 : i32, i32, i32
  }
  func.func @transform_9(%arg0: i32, %arg1: i32, %arg2: i32) -> (i32, i32, i32) {
    %c0_i32 = arith.constant 0 : i32
    %c0_i32_0 = arith.constant 0 : i32
    return %arg0, %arg1, %c0_i32 : i32, i32, i32
  }
}

</mosaic_0001>

<llo_original>
// kernel: tpu_custom_call.1
$region0: #{tpu_custom_call.1}
  #allocation0 [shape = 'u32[]', space=smem, size = 0x4, offset = 0x4, fixed_abs, tag = 'smem constant byte address 0x4 - core index']
  #allocation1 [shape = 'u32[144,128]{1,0:T(1,128)}', space=vmem, size = 0x12000, scoped, tag = 'internal scratch']
  #allocation2 [shape = 'f32[4,8,8]{2,1,0:T(8,128)}', space=vmem, size = 0x4000, scoped, tag = 'scratch operand']
  %s0 = inlined_call_operand.hbm [shape: f32[2,4,8], index: 0, kind: input, shape index: {}]
  %s1 = inlined_call_operand.vmem [shape: f32[2,2,8,8], index: 1, kind: input, shape index: {}]
  %s2 = inlined_call_operand.vmem [shape: f32[2,2,8,1], index: 2, kind: input, shape index: {}]
  %s3 = inlined_call_operand.vmem [shape: f32[2,2,2,8], index: 3, kind: input, shape index: {}]
  %s4 = inlined_call_operand.hbm [shape: f32[2,2,8,32], index: 4, kind: input, shape index: {}]
  %s5 = inlined_call_operand.vmem [shape: f32[2,1,32], index: 5, kind: input, shape index: {}]
  %s6 = inlined_call_operand.vmem [shape: f32[1,32], index: 6, kind: input, shape index: {}]
  %s7 = inlined_call_operand.vmem [shape: f32[1,32], index: 7, kind: input, shape index: {}]
  %s8 = inlined_call_operand.hbm [shape: f32[2,4,256], index: 8, kind: output, shape index: {0}]
  %s9 = inlined_call_operand.hbm [shape: f32[2,4,64], index: 9, kind: output, shape index: {1}]
  %10 = xla_tuple %s8, %s9
  %s11 = sld [smem:[#allocation0]]
  $region89: #{tpu_custom_call.1} parent=0
    _
  %s13 = ssub.s32 1, %s11
  %s14 = scalar_select 0, %s13, %s11
  $region1: #{tpu_custom_call.1} parent=0
    #allocation3 [shape = 'u8[4096]{0}', space=vmem, size = 0x1000, scoped, tag = 'input window, operand 0']
    #allocation4 [shape = 's32[2]{0}', space=sflag, size = 0x8, scoped, tag = 'scoped memory for tpu_custom_call.1']
    #allocation5 [shape = 's32[2]{0}', space=sflag, size = 0x8, scoped, tag = 'scoped memory for tpu_custom_call.1']
    #allocation6 [shape = 'u8[8192]{0}', space=vmem, size = 0x2000, scoped, tag = 'input window, operand 4']
    #allocation7 [shape = 's32[2]{0}', space=sflag, size = 0x8, scoped, tag = 'scoped memory for tpu_custom_call.1']
    #allocation8 [shape = 'u8[8192]{0}', space=vmem, size = 0x2000, scoped, tag = 'output window, operand 0']
    #allocation9 [shape = 'u8[4096]{0}', space=vmem, size = 0x1000, scoped, tag = 'output window, operand 1']
    #allocation10 [shape = 's32[2]{0}', space=sflag, size = 0x8, scoped, tag = 'scoped memory for tpu_custom_call.1']
    %15 = vsyncpa [#allocation4], 0
    %s16 = scalar_lea.sflag [#allocation4], 1
    %17 = vsyncpa %s16, 0
    %18 = vsyncpa [#allocation7], 0
    %s19 = scalar_lea.sflag [#allocation7], 1
    %20 = vsyncpa %s19, 0
    %21 = vsyncpa [#allocation5], 0
    %s22 = scalar_lea.sflag [#allocation5], 1
    %23 = vsyncpa %s22, 0
    %24 = vsyncpa [#allocation10], 0
    %s25 = scalar_lea.sflag [#allocation10], 1
    %26 = vsyncpa %s25, 0
    loop: start=0, step=1, limit=6
    $region2: #{tpu_custom_call.1} parent=1 // loop_pre_header
      _
    $region3: #{tpu_custom_call.1} parent=1 // loop_header
      %s28 = sphi 0, %s32
      %p29 = scmp.ge.s32.totalorder %s28, 6
      %s35 = sphi 0, %s54
      %s36 = sphi 0, %s50
      %s37 = sphi 0, %s46
      %s38 = sphi 0, %s35
      %s39 = sphi 0, %s36
      %s40 = sphi 0, %s37
      %s41 = sphi 0, %s38
      %s42 = sphi 0, %s39
      %s43 = sphi 0, %s40
      %s59 = sphi 0, %s61
      %s62 = sphi 0, %s59
      %s63 = sphi 0, %s62
      %s79 = sphi 0, %s63
      %s87 = sphi 0, %s89
      %s90 = sphi 0, %s87
      %s91 = sphi 0, %s90
      %s107 = sphi 0, %s91
      %s115 = sphi 0, %s117
      %s118 = sphi 0, %s115
      %s119 = sphi 0, %s118
      %s135 = sphi 0, %s119
      %s143 = sphi 0, %s145
      %s146 = sphi 0, %s143
      %s147 = sphi 0, %s146
      %s163 = sphi 0, %s147
      %s171 = sphi 0, %s173
      %s174 = sphi 0, %s171
      %s175 = sphi 0, %s174
      %s191 = sphi 0, %s175
      %s197 = sphi 0, %s199
      %s200 = sphi 0, %s197
      %s201 = sphi 0, %s200
      %s217 = sphi 0, %s201
      %s221 = sphi 0, %s221
      %s223 = sphi 0, %s221
      %s224 = sphi 0, %s223
      %s238 = sphi 0, %s224
      %s242 = sphi 0, %s242
      %s244 = sphi 0, %s242
      %s245 = sphi 0, %s244
      %s259 = sphi 0, %s245
      %s267 = sphi 0, %s269
      %s270 = sphi 0, %s267
      %s271 = sphi 0, %s270
      %s287 = sphi 0, %s271
      %s295 = sphi 0, %s297
      %s298 = sphi 0, %s295
      %s299 = sphi 0, %s298
      %s315 = sphi 0, %s299
    $region4: #{tpu_custom_call.1} parent=1 // loop_header_branch
      %31 = sbr.rel (%p29) target = $region8
    $region5: #{tpu_custom_call.1} parent=1 // loop_body
      %s33 = ssub.s32 %s28, 1
      %s34 = ssub.s32 %s28, 2
      %s44 = sadd.s32 1, %s37
      %p45 = scmp.ge.s32.totalorder %s44, 2
      %s46 = scalar_select %p45, 0, %s44
      %s47 = sadd.s32 1, %s36
      %s48 = scalar_select %p45, %s47, %s36
      %p49 = scmp.ge.s32.totalorder %s48, 1
      %s50 = scalar_select %p49, 0, %s48
      %s51 = sadd.s32 1, %s35
      %s52 = scalar_select %p49, %s51, %s35
      %p53 = scmp.ge.s32.totalorder %s52, 2
      %s54 = scalar_select %p53, 0, %s52
      %s55 = ssub.s32 %s35, %s54
      %s56 = ssub.s32 %s36, %s50
      %s57 = sor.u32 %s55, %s56
      %p58 = scmp.eq.s32.totalorder %s57, 0
      %s60 = sadd.s32 %s59, 1
      %s61 = scalar_select %p58, %s59, %s60
      %p64 = pneg %p58
      %p65 = scmp.eq.s32.totalorder %s28, 3
      %p66 = por %p64, %p65
      %p67 = scmp.ne.s32.totalorder %s59, %s62
      %p68 = scmp.eq.s32.totalorder %s28, 0
      %p69 = por %p67, %p68
      %p70 = scmp.ne.s32.totalorder %s59, %s62
      %p71 = scmp.eq.s32.totalorder %s33, 3
      %p72 = por %p70, %p71
      %p73 = scmp.ne.s32.totalorder %s62, %s63
      %p74 = scmp.eq.s32.totalorder %s33, 0
      %p75 = por %p73, %p74
      %p76 = scmp.ne.s32.totalorder %s62, %s63
      %p77 = scmp.eq.s32.totalorder %s34, 3
      %p78 = por %p76, %p77
      %p80 = scmp.ne.s32.totalorder %s63, %s79
      %p81 = scmp.eq.s32.totalorder %s34, 0
      %p82 = por %p80, %p81
      %s83 = ssub.s32 %s35, %s54
      %s84 = ssub.s32 %s37, %s46
      %s85 = sor.u32 %s83, %s84
      %p86 = scmp.eq.s32.totalorder %s85, 0
      %s88 = sadd.s32 %s87, 1
      %s89 = scalar_select %p86, %s87, %s88
      %p92 = pneg %p86
      %p93 = scmp.eq.s32.totalorder %s28, 3
      %p94 = por %p92, %p93
      %p95 = scmp.ne.s32.totalorder %s87, %s90
      %p96 = scmp.eq.s32.totalorder %s28, 0
      %p97 = por %p95, %p96
      %p98 = scmp.ne.s32.totalorder %s87, %s90
      %p99 = scmp.eq.s32.totalorder %s33, 3
      %p100 = por %p98, %p99
      %p101 = scmp.ne.s32.totalorder %s90, %s91
      %p102 = scmp.eq.s32.totalorder %s33, 0
      %p103 = por %p101, %p102
      %p104 = scmp.ne.s32.totalorder %s90, %s91
      %p105 = scmp.eq.s32.totalorder %s34, 3
      %p106 = por %p104, %p105
      %p108 = scmp.ne.s32.totalorder %s91, %s107
      %p109 = scmp.eq.s32.totalorder %s34, 0
      %p110 = por %p108, %p109
      %s111 = ssub.s32 %s35, %s54
      %s112 = ssub.s32 %s37, %s46
      %s113 = sor.u32 %s111, %s112
      %p114 = scmp.eq.s32.totalorder %s113, 0
      %s116 = sadd.s32 %s115, 1
      %s117 = scalar_select %p114, %s115, %s116
      %p120 = pneg %p114
      %p121 = scmp.eq.s32.totalorder %s28, 3
      %p122 = por %p120, %p121
      %p123 = scmp.ne.s32.totalorder %s115, %s118
      %p124 = scmp.eq.s32.totalorder %s28, 0
      %p125 = por %p123, %p124
      %p126 = scmp.ne.s32.totalorder %s115, %s118
      %p127 = scmp.eq.s32.totalorder %s33, 3
      %p128 = por %p126, %p127
      %p129 = scmp.ne.s32.totalorder %s118, %s119
      %p130 = scmp.eq.s32.totalorder %s33, 0
      %p131 = por %p129, %p130
      %p132 = scmp.ne.s32.totalorder %s118, %s119
      %p133 = scmp.eq.s32.totalorder %s34, 3
      %p134 = por %p132, %p133
      %p136 = scmp.ne.s32.totalorder %s119, %s135
      %p137 = scmp.eq.s32.totalorder %s34, 0
      %p138 = por %p136, %p137
      %s139 = ssub.s32 %s35, %s54
      %s140 = ssub.s32 %s37, %s46
      %s141 = sor.u32 %s139, %s140
      %p142 = scmp.eq.s32.totalorder %s141, 0
      %s144 = sadd.s32 %s143, 1
      %s145 = scalar_select %p142, %s143, %s144
      %p148 = pneg %p142
      %p149 = scmp.eq.s32.totalorder %s28, 3
      %p150 = por %p148, %p149
      %p151 = scmp.ne.s32.totalorder %s143, %s146
      %p152 = scmp.eq.s32.totalorder %s28, 0
      %p153 = por %p151, %p152
      %p154 = scmp.ne.s32.totalorder %s143, %s146
      %p155 = scmp.eq.s32.totalorder %s33, 3
      %p156 = por %p154, %p155
      %p157 = scmp.ne.s32.totalorder %s146, %s147
      %p158 = scmp.eq.s32.totalorder %s33, 0
      %p159 = por %p157, %p158
      %p160 = scmp.ne.s32.totalorder %s146, %s147
      %p161 = scmp.eq.s32.totalorder %s34, 3
      %p162 = por %p160, %p161
      %p164 = scmp.ne.s32.totalorder %s147, %s163
      %p165 = scmp.eq.s32.totalorder %s34, 0
      %p166 = por %p164, %p165
      %s167 = ssub.s32 %s35, %s54
      %s168 = ssub.s32 %s37, %s46
      %s169 = sor.u32 %s167, %s168
      %p170 = scmp.eq.s32.totalorder %s169, 0
      %s172 = sadd.s32 %s171, 1
      %s173 = scalar_select %p170, %s171, %s172
      %p176 = pneg %p170
      %p177 = scmp.eq.s32.totalorder %s28, 3
      %p178 = por %p176, %p177
      %p179 = scmp.ne.s32.totalorder %s171, %s174
      %p180 = scmp.eq.s32.totalorder %s28, 0
      %p181 = por %p179, %p180
      %p182 = scmp.ne.s32.totalorder %s171, %s174
      %p183 = scmp.eq.s32.totalorder %s33, 3
      %p184 = por %p182, %p183
      %p185 = scmp.ne.s32.totalorder %s174, %s175
      %p186 = scmp.eq.s32.totalorder %s33, 0
      %p187 = por %p185, %p186
      %p188 = scmp.ne.s32.totalorder %s174, %s175
      %p189 = scmp.eq.s32.totalorder %s34, 3
      %p190 = por %p188, %p189
      %p192 = scmp.ne.s32.totalorder %s175, %s191
      %p193 = scmp.eq.s32.totalorder %s34, 0
      %p194 = por %p192, %p193
      %s195 = ssub.s32 %s37, %s46
      %p196 = scmp.eq.s32.totalorder %s195, 0
      %s198 = sadd.s32 %s197, 1
      %s199 = scalar_select %p196, %s197, %s198
      %p202 = pneg %p196
      %p203 = scmp.eq.s32.totalorder %s28, 3
      %p204 = por %p202, %p203
      %p205 = scmp.ne.s32.totalorder %s197, %s200
      %p206 = scmp.eq.s32.totalorder %s28, 0
      %p207 = por %p205, %p206
      %p208 = scmp.ne.s32.totalorder %s197, %s200
      %p209 = scmp.eq.s32.totalorder %s33, 3
      %p210 = por %p208, %p209
      %p211 = scmp.ne.s32.totalorder %s200, %s201
      %p212 = scmp.eq.s32.totalorder %s33, 0
      %p213 = por %p211, %p212
      %p214 = scmp.ne.s32.totalorder %s200, %s201
      %p215 = scmp.eq.s32.totalorder %s34, 3
      %p216 = por %p214, %p215
      %p218 = scmp.ne.s32.totalorder %s201, %s217
      %p219 = scmp.eq.s32.totalorder %s34, 0
      %p220 = por %p218, %p219
      %s222 = sadd.s32 %s221, 1
      %p225 = scmp.eq.s32.totalorder %s28, 3
      %p226 = scmp.ne.s32.totalorder %s221, %s223
      %p227 = scmp.eq.s32.totalorder %s28, 0
      %p228 = por %p226, %p227
      %p229 = scmp.ne.s32.totalorder %s221, %s223
      %p230 = scmp.eq.s32.totalorder %s33, 3
      %p231 = por %p229, %p230
      %p232 = scmp.ne.s32.totalorder %s223, %s224
      %p233 = scmp.eq.s32.totalorder %s33, 0
      %p234 = por %p232, %p233
      %p235 = scmp.ne.s32.totalorder %s223, %s224
      %p236 = scmp.eq.s32.totalorder %s34, 3
      %p237 = por %p235, %p236
      %p239 = scmp.ne.s32.totalorder %s224, %s238
      %p240 = scmp.eq.s32.totalorder %s34, 0
      %p241 = por %p239, %p240
      %s243 = sadd.s32 %s242, 1
      %p246 = scmp.eq.s32.totalorder %s28, 3
      %p247 = scmp.ne.s32.totalorder %s242, %s244
      %p248 = scmp.eq.s32.totalorder %s28, 0
      %p249 = por %p247, %p248
      %p250 = scmp.ne.s32.totalorder %s242, %s244
      %p251 = scmp.eq.s32.totalorder %s33, 3
      %p252 = por %p250, %p251
      %p253 = scmp.ne.s32.totalorder %s244, %s245
      %p254 = scmp.eq.s32.totalorder %s33, 0
      %p255 = por %p253, %p254
      %p256 = scmp.ne.s32.totalorder %s244, %s245
      %p257 = scmp.eq.s32.totalorder %s34, 3
      %p258 = por %p256, %p257
      %p260 = scmp.ne.s32.totalorder %s245, %s259
      %p261 = scmp.eq.s32.totalorder %s34, 0
      %p262 = por %p260, %p261
      %s263 = ssub.s32 %s35, %s54
      %s264 = ssub.s32 %s36, %s50
      %s265 = sor.u32 %s263, %s264
      %p266 = scmp.eq.s32.totalorder %s265, 0
      %s268 = sadd.s32 %s267, 1
      %s269 = scalar_select %p266, %s267, %s268
      %p272 = pneg %p266
      %p273 = scmp.eq.s32.totalorder %s28, 3
      %p274 = por %p272, %p273
      %p275 = scmp.ne.s32.totalorder %s267, %s270
      %p276 = scmp.eq.s32.totalorder %s28, 0
      %p277 = por %p275, %p276
      %p278 = scmp.ne.s32.totalorder %s267, %s270
      %p279 = scmp.eq.s32.totalorder %s33, 3
      %p280 = por %p278, %p279
      %p281 = scmp.ne.s32.totalorder %s270, %s271
      %p282 = scmp.eq.s32.totalorder %s33, 0
      %p283 = por %p281, %p282
      %p284 = scmp.ne.s32.totalorder %s270, %s271
      %p285 = scmp.eq.s32.totalorder %s34, 3
      %p286 = por %p284, %p285
      %p288 = scmp.ne.s32.totalorder %s271, %s287
      %p289 = scmp.eq.s32.totalorder %s34, 0
      %p290 = por %p288, %p289
      %s291 = ssub.s32 %s35, %s54
      %s292 = ssub.s32 %s36, %s50
      %s293 = sor.u32 %s291, %s292
      %p294 = scmp.eq.s32.totalorder %s293, 0
      %s296 = sadd.s32 %s295, 1
      %s297 = scalar_select %p294, %s295, %s296
      %p300 = pneg %p294
      %p301 = scmp.eq.s32.totalorder %s28, 3
      %p302 = por %p300, %p301
      %p303 = scmp.ne.s32.totalorder %s295, %s298
      %p304 = scmp.eq.s32.totalorder %s28, 0
      %p305 = por %p303, %p304
      %p306 = scmp.ne.s32.totalorder %s295, %s298
      %p307 = scmp.eq.s32.totalorder %s33, 3
      %p308 = por %p306, %p307
      %p309 = scmp.ne.s32.totalorder %s298, %s299
      %p310 = scmp.eq.s32.totalorder %s33, 0
      %p311 = por %p309, %p310
      %p312 = scmp.ne.s32.totalorder %s298, %s299
      %p313 = scmp.eq.s32.totalorder %s34, 3
      %p314 = por %p312, %p313
      %p316 = scmp.ne.s32.totalorder %s299, %s315
      %p317 = scmp.eq.s32.totalorder %s34, 0
      %p318 = por %p316, %p317
      %p319 = scmp.le.s32.totalorder 1, %s28
      %p320 = scmp.lt.s32.totalorder %s28, 5
      %p321 = pnand %p319, %p320
      %p322 = pneg %p321
      // Predicated region
      $region9: #{tpu_custom_call.1} parent=5 // pred_check
        _
      $region10: #{tpu_custom_call.1} parent=5 // pred_check_branch
        %324 = sbr.rel (%p321) target = $region12
      $region11: #{tpu_custom_call.1} parent=5 // pred_region
        %s325 = ssub.s32 %s28, 1
        // Predicated region
        $region13: #{tpu_custom_call.1} parent=11 // pred_check
          %p326 = pneg %p234
        $region14: #{tpu_custom_call.1} parent=11 // pred_check_branch
          %328 = sbr.rel (%p326) target = $region16
        $region15: #{tpu_custom_call.1} parent=11 // pred_region
          _
        $region16: #{tpu_custom_call.1} parent=11 // pred_fallthru
          _
        // Predicated region
        $region17: #{tpu_custom_call.1} parent=11 // pred_check
          %p329 = pneg %p255
        $region18: #{tpu_custom_call.1} parent=11 // pred_check_branch
          %331 = sbr.rel (%p329) target = $region20
        $region19: #{tpu_custom_call.1} parent=11 // pred_region
          _
        $region20: #{tpu_custom_call.1} parent=11 // pred_fallthru
          _
      $region12: #{tpu_custom_call.1} parent=5 // pred_fallthru
        _
      %p332 = scmp.lt.s32.totalorder %s28, 4
      // Predicated region
      $region21: #{tpu_custom_call.1} parent=5 // pred_check
        %p333 = pneg %p332
      $region22: #{tpu_custom_call.1} parent=5 // pred_check_branch
        %335 = sbr.rel (%p333) target = $region24
      $region23: #{tpu_custom_call.1} parent=5 // pred_region
        // Predicated region
        $region25: #{tpu_custom_call.1} parent=23 // pred_check
          %p336 = pneg %p69
        $region26: #{tpu_custom_call.1} parent=23 // pred_check_branch
          %338 = sbr.rel (%p336) target = $region28
        $region27: #{tpu_custom_call.1} parent=23 // pred_region
          %s339 = sand.u32 %s59, 1
          %s340 = scalar_lea.sflag [#allocation4], %s339
          %s341 = sand.u32 %s59, 1
          %s342 = smul.addr %s341, 4
          %s343 = scalar_lea.vmem [#allocation3], %s342
          %s345 = ssub.s32 64, 64
          %346 = vsyncadd %s340, %s345
          %s347 = sadd.s32 %s36, %s35
          %s348 = smul.addr %s347, 64
          %s349 = scalar_lea.hbm %s0, %s348
          %s351 = sshll.u32 %s343, 4
          %s352 = int_to_ptr.vmem [resolvable:$true] %s351
          %354 = dma.hbm_to_vmem [thread:$0]  %s349, 64, %s352, %s340
        $region28: #{tpu_custom_call.1} parent=23 // pred_fallthru
          _
        // Predicated region
        $region29: #{tpu_custom_call.1} parent=23 // pred_check
          %p355 = pneg %p97
        $region30: #{tpu_custom_call.1} parent=23 // pred_check_branch
          %357 = sbr.rel (%p355) target = $region32
        $region31: #{tpu_custom_call.1} parent=23 // pred_region
          %p358 = scmp.lt.s32.totalorder %s35, 1
          %s359 = scalar_select %p358, %s35, 1
          %p360 = scmp.lt.s32.totalorder %s37, 1
          %s361 = scalar_select %p360, %s37, 1
          %s362 = smul.addr %s359, 2
          %s363 = sadd.s32 %s361, %s362
          %s364 = smul.addr %s363, 8
          %s365 = scalar_lea.vmem %s1, %s364
        $region32: #{tpu_custom_call.1} parent=23 // pred_fallthru
          _
        // Predicated region
        $region33: #{tpu_custom_call.1} parent=23 // pred_check
          %p366 = pneg %p125
        $region34: #{tpu_custom_call.1} parent=23 // pred_check_branch
          %368 = sbr.rel (%p366) target = $region36
        $region35: #{tpu_custom_call.1} parent=23 // pred_region
          %p369 = scmp.lt.s32.totalorder %s35, 1
          %s370 = scalar_select %p369, %s35, 1
          %p371 = scmp.lt.s32.totalorder %s37, 1
          %s372 = scalar_select %p371, %s37, 1
          %s373 = smul.addr %s370, 2
          %s374 = sadd.s32 %s372, %s373
          %s375 = smul.addr %s374, 8
          %s376 = scalar_lea.vmem %s2, %s375
        $region36: #{tpu_custom_call.1} parent=23 // pred_fallthru
          _
        // Predicated region
        $region37: #{tpu_custom_call.1} parent=23 // pred_check
          %p377 = pneg %p153
        $region38: #{tpu_custom_call.1} parent=23 // pred_check_branch
          %379 = sbr.rel (%p377) target = $region40
        $region39: #{tpu_custom_call.1} parent=23 // pred_region
          %p380 = scmp.lt.s32.totalorder %s35, 1
          %s381 = scalar_select %p380, %s35, 1
          %p382 = scmp.lt.s32.totalorder %s37, 1
          %s383 = scalar_select %p382, %s37, 1
          %s384 = smul.addr %s381, 2
          %s385 = sadd.s32 %s383, %s384
          %s386 = smul.addr %s385, 2
          %s387 = scalar_lea.vmem %s3, %s386
        $region40: #{tpu_custom_call.1} parent=23 // pred_fallthru
          _
        // Predicated region
        $region41: #{tpu_custom_call.1} parent=23 // pred_check
          %p388 = pneg %p181
        $region42: #{tpu_custom_call.1} parent=23 // pred_check_branch
          %390 = sbr.rel (%p388) target = $region44
        $region43: #{tpu_custom_call.1} parent=23 // pred_region
          %s391 = sand.u32 %s171, 1
          %s392 = scalar_lea.sflag [#allocation7], %s391
          %s393 = sand.u32 %s171, 1
          %s394 = smul.addr %s393, 8
          %s395 = scalar_lea.vmem [#allocation6], %s394
          %s397 = ssub.s32 128, 128
          %398 = vsyncadd %s392, %s397
          %s399 = smul.addr %s35, 2
          %s400 = sadd.s32 %s37, %s399
          %s401 = smul.addr %s400, 128
          %s402 = scalar_lea.hbm %s4, %s401
          %s404 = sshll.u32 %s395, 4
          %s405 = int_to_ptr.vmem [resolvable:$true] %s404
          %407 = dma.hbm_to_vmem [thread:$0]  %s402, 128, %s405, %s392
        $region44: #{tpu_custom_call.1} parent=23 // pred_fallthru
          _
        // Predicated region
        $region45: #{tpu_custom_call.1} parent=23 // pred_check
          %p408 = pneg %p207
        $region46: #{tpu_custom_call.1} parent=23 // pred_check_branch
          %410 = sbr.rel (%p408) target = $region48
        $region47: #{tpu_custom_call.1} parent=23 // pred_region
          %p411 = scmp.lt.s32.totalorder %s37, 1
          %s412 = scalar_select %p411, %s37, 1
          %s413 = scalar_lea.vmem %s5, %s412
        $region48: #{tpu_custom_call.1} parent=23 // pred_fallthru
          _
      $region24: #{tpu_custom_call.1} parent=5 // pred_fallthru
        _
      %p414 = scmp.le.s32.totalorder 1, %s28
      %p415 = scmp.lt.s32.totalorder %s28, 5
      %p416 = pnand %p414, %p415
      %p417 = pneg %p416
      // Predicated region
      $region49: #{tpu_custom_call.1} parent=5 // pred_check
        _
      $region50: #{tpu_custom_call.1} parent=5 // pred_check_branch
        %419 = sbr.rel (%p416) target = $region52
      $region51: #{tpu_custom_call.1} parent=5 // pred_region
        %s420 = ssub.s32 %s28, 1
        %s421 = sand.u32 %s62, 1
        %s422 = scalar_lea.sflag [#allocation4], %s421
        %s423 = sand.u32 %s62, 1
        %s424 = smul.addr %s423, 4
        %s425 = scalar_lea.vmem [#allocation3], %s424
        // Predicated region
        $region53: #{tpu_custom_call.1} parent=51 // pred_check
          %p426 = pneg %p75
        $region54: #{tpu_custom_call.1} parent=51 // pred_check_branch
          %428 = sbr.rel (%p426) target = $region56
        $region55: #{tpu_custom_call.1} parent=51 // pred_region
          %429 = dma.done %s422, 64
        $region56: #{tpu_custom_call.1} parent=51 // pred_fallthru
          _
        %s430 = sand.u32 %s174, 1
        %s431 = scalar_lea.sflag [#allocation7], %s430
        %s432 = sand.u32 %s174, 1
        %s433 = smul.addr %s432, 8
        %s434 = scalar_lea.vmem [#allocation6], %s433
        // Predicated region
        $region57: #{tpu_custom_call.1} parent=51 // pred_check
          %p435 = pneg %p187
        $region58: #{tpu_custom_call.1} parent=51 // pred_check_branch
          %437 = sbr.rel (%p435) target = $region60
        $region59: #{tpu_custom_call.1} parent=51 // pred_region
          %438 = dma.done %s431, 128
        $region60: #{tpu_custom_call.1} parent=51 // pred_fallthru
          _
        %s439 = sand.u32 %s62, 1
        %s440 = scalar_lea.sflag [#allocation4], %s439
        %s441 = sand.u32 %s62, 1
        %s442 = smul.addr %s441, 4
        %s443 = scalar_lea.vmem [#allocation3], %s442
        %p444 = pneg %p75
        %p445 = pneg %p72
        %p446 = scmp.lt.s32.totalorder %s38, 1
        %s447 = scalar_select %p446, %s38, 1
        %p448 = scmp.lt.s32.totalorder %s40, 1
        %s449 = scalar_select %p448, %s40, 1
        %s450 = smul.addr %s447, 2
        %s451 = sadd.s32 %s449, %s450
        %s452 = smul.addr %s451, 8
        %s453 = scalar_lea.vmem %s1, %s452
        %p454 = pneg %p103
        %p455 = pneg %p100
        %p456 = scmp.lt.s32.totalorder %s38, 1
        %s457 = scalar_select %p456, %s38, 1
        %p458 = scmp.lt.s32.totalorder %s40, 1
        %s459 = scalar_select %p458, %s40, 1
        %s460 = smul.addr %s457, 2
        %s461 = sadd.s32 %s459, %s460
        %s462 = smul.addr %s461, 8
        %s463 = scalar_lea.vmem %s2, %s462
        %p464 = pneg %p131
        %p465 = pneg %p128
        %p466 = scmp.lt.s32.totalorder %s38, 1
        %s467 = scalar_select %p466, %s38, 1
        %p468 = scmp.lt.s32.totalorder %s40, 1
        %s469 = scalar_select %p468, %s40, 1
        %s470 = smul.addr %s467, 2
        %s471 = sadd.s32 %s469, %s470
        %s472 = smul.addr %s471, 2
        %s473 = scalar_lea.vmem %s3, %s472
        %p474 = pneg %p159
        %p475 = pneg %p156
        %s476 = sand.u32 %s174, 1
        %s477 = scalar_lea.sflag [#allocation7], %s476
        %s478 = sand.u32 %s174, 1
        %s479 = smul.addr %s478, 8
        %s480 = scalar_lea.vmem [#allocation6], %s479
        %p481 = pneg %p187
        %p482 = pneg %p184
        %p483 = scmp.lt.s32.totalorder %s40, 1
        %s484 = scalar_select %p483, %s40, 1
        %s485 = scalar_lea.vmem %s5, %s484
        %p486 = pneg %p213
        %p487 = pneg %p210
        %p488 = pneg %p234
        %p489 = pneg %p231
        %p490 = pneg %p255
        %p491 = pneg %p252
        %p492 = pneg %p283
        %p493 = pneg %p280
        %s494 = sand.u32 %s270, 1
        %s495 = scalar_lea.sflag [#allocation5], %s494
        %s496 = sand.u32 %s270, 1
        %s497 = smul.addr %s496, 8
        %s498 = scalar_lea.vmem [#allocation8], %s497
        %p499 = pneg %p311
        %p500 = pneg %p308
        %s501 = sand.u32 %s298, 1
        %s502 = scalar_lea.sflag [#allocation10], %s501
        %s503 = sand.u32 %s298, 1
        %s504 = smul.addr %s503, 4
        %s505 = scalar_lea.vmem [#allocation9], %s504
        %p506 = scmp.lt.s32.totalorder %s38, 1
        %s507 = scalar_select %p506, %s38, 1
        %p508 = scmp.lt.s32.totalorder %s40, 1
        %s509 = scalar_select %p508, %s40, 1
        %s510 = smul.addr %s507, 2
        %s511 = sadd.s32 %s509, %s510
        %s512 = smul.addr %s511, 8
        %s513 = scalar_lea.vmem %s1, %s512
        %p514 = scmp.lt.s32.totalorder %s38, 1
        %s515 = scalar_select %p514, %s38, 1
        %p516 = scmp.lt.s32.totalorder %s40, 1
        %s517 = scalar_select %p516, %s40, 1
        %s518 = smul.addr %s515, 2
        %s519 = sadd.s32 %s517, %s518
        %s520 = smul.addr %s519, 8
        %s521 = scalar_lea.vmem %s2, %s520
        %p522 = scmp.lt.s32.totalorder %s38, 1
        %s523 = scalar_select %p522, %s38, 1
        %p524 = scmp.lt.s32.totalorder %s40, 1
        %s525 = scalar_select %p524, %s40, 1
        %s526 = smul.addr %s523, 2
        %s527 = sadd.s32 %s525, %s526
        %s528 = smul.addr %s527, 2
        %s529 = scalar_lea.vmem %s3, %s528
        %p530 = scmp.lt.s32.totalorder %s40, 1
        %s531 = scalar_select %p530, %s40, 1
        %s532 = scalar_lea.vmem %s5, %s531
        %v533 = vld [vmem:[%s425] sm:$0xf]
        %v534 = vld [vmem:[%s513] sm:$0xff]
        %v535 = vld [vmem:[%s521] sm:$0xff]
        %v536 = vld [vmem:[%s529] sm:$0x1]
        %v537 = vld [vmem:[%s529 + $0x1] sm:$0x1]
        %v538 = vlaneseq
        %v539 = vshrl.u32 %v538, 7
        %v540 = vsub.s32 0, %v539
        %v541 = vrot.slane %v533, %v540
        %543 = vbcast.lane.b32.xlu0 %v541, 256
        %v544 = vpop.permute.xlu0 %543
        %v545 = vlaneseq
        %v546 = vshrl.u32 %v545, 7
        %v547 = vsub.s32 1, %v546
        %v548 = vrot.slane %v533, %v547
        %550 = vbcast.lane.b32.xlu0 %v548, 256
        %v551 = vpop.permute.xlu0 %550
        %v552 = vlaneseq
        %v553 = vshrl.u32 %v552, 7
        %v554 = vsub.s32 2, %v553
        %v555 = vrot.slane %v533, %v554
        %557 = vbcast.lane.b32.xlu0 %v555, 256
        %v558 = vpop.permute.xlu0 %557
        %v559 = vlaneseq
        %v560 = vshrl.u32 %v559, 7
        %v561 = vsub.s32 3, %v560
        %v562 = vrot.slane %v533, %v561
        %564 = vbcast.lane.b32.xlu0 %v562, 256
        %v565 = vpop.permute.xlu0 %564
        %v568 = vunpack.c.l.s4 1966171168
        %v569 = vunpack.c.0.s8 %v568
        %v570 = vlaneseq
        %v571 = vshrl.u32 %v570, 7
        %v572 = vsub.s32 %v569, %v571
        %v573 = vrot.slane %v533, %v572
        %v574 = vcombine.high %v573, %v573
        %v576 = vunpack.c.l.s4 1966171168
        %v577 = vunpack.c.0.s8 %v576
        %v578 = vlaneseq
        %v579 = vshrl.u32 %v578, 7
        %v580 = vsub.s32 %v577, %v579
        %v581 = vrot.slane %v573, %v580
        %v583 = vunpack.c.l.s4 1966171168
        %v584 = vunpack.c.0.s8 %v583
        %v585 = vlaneseq
        %v586 = vshrl.u32 %v585, 7
        %v587 = vsub.s32 %v584, %v586
        %v588 = vrot.slane %v574, %v587
        %v589 = vcombine.high %v581, %v581
        %v590 = vcombine.high %v588, %v588
        %596 = vset.pattern.permute.xlu0 0
        %597 = vperm.xlu0 %596, %v535
        %v598 = vpop.permute.xlu0 %597
        %v600 = vlaneseq
        %v601 = vshrl.u32 %v600, 7
        %v602 = vsub.s32 0, %v601
        %v603 = vrot.slane %v581, %v602
        %v604 = vlaneseq
        %v605 = vshrl.u32 %v604, 7
        %v606 = vsub.s32 0, %v605
        %v607 = vrot.slane %v588, %v606
        %v608 = vlaneseq
        %v609 = vshrl.u32 %v608, 7
        %v610 = vsub.s32 0, %v609
        %v611 = vrot.slane %v589, %v610
        %v612 = vlaneseq
        %v613 = vshrl.u32 %v612, 7
        %v614 = vsub.s32 0, %v613
        %v615 = vrot.slane %v590, %v614
        %v620 = vmul.f32 %v598, %v603
        %v621 = vmul.f32 %v598, %v607
        %v622 = vmul.f32 %v598, %v611
        %v623 = vmul.f32 %v598, %v615
        %v624 = vadd.f32 %v534, %v620
        %v625 = vadd.f32 %v534, %v621
        %v626 = vadd.f32 %v534, %v622
        %v627 = vadd.f32 %v534, %v623
        %v628 = vmul.f32 %v537, %v581
        %v629 = vmul.f32 %v537, %v588
        %v630 = vmul.f32 %v537, %v589
        %v631 = vmul.f32 %v537, %v590
        %v632 = vadd.f32 %v536, %v628
        %v633 = vadd.f32 %v536, %v629
        %v634 = vadd.f32 %v536, %v630
        %v635 = vadd.f32 %v536, %v631
        %v636 = vlaneseq
        %v637 = vshrl.u32 %v636, 7
        %v638 = vsub.s32 0, %v637
        %v639 = vrot.slane %v632, %v638
        %v640 = vlaneseq
        %v641 = vshrl.u32 %v640, 7
        %v642 = vsub.s32 0, %v641
        %v643 = vrot.slane %v633, %v642
        %v644 = vlaneseq
        %v645 = vshrl.u32 %v644, 7
        %v646 = vsub.s32 0, %v645
        %v647 = vrot.slane %v634, %v646
        %v648 = vlaneseq
        %v649 = vshrl.u32 %v648, 7
        %v650 = vsub.s32 0, %v649
        %v651 = vrot.slane %v635, %v650
        %v652 = vmul.f32 %v544, %v639
        %v653 = vmul.f32 %v551, %v643
        %v654 = vmul.f32 %v558, %v647
        %v655 = vmul.f32 %v565, %v651
        %v656 = vadd.f32 %v624, %v652
        %v657 = vadd.f32 %v625, %v653
        %v658 = vadd.f32 %v626, %v654
        %v659 = vadd.f32 %v627, %v655
        %vm660 = vcmask 64512
        %v661 = vsel %vm660, %v656, -inf
        %662 = vmax.xlane.f32.xlu0 %v661
        %v663 = vpop.xlane.xlu0 %662
        %v664 = vsel %vm660, %v657, -inf
        %665 = vmax.xlane.f32.xlu0 %v664
        %v666 = vpop.xlane.xlu0 %665
        %v667 = vsel %vm660, %v658, -inf
        %668 = vmax.xlane.f32.xlu0 %v667
        %v669 = vpop.xlane.xlu0 %668
        %v670 = vsel %vm660, %v659, -inf
        %671 = vmax.xlane.f32.xlu0 %v670
        %v672 = vpop.xlane.xlu0 %671
        %v673 = vsub.f32 %v656, %v663
        %v674 = vsub.f32 %v657, %v666
        %v675 = vsub.f32 %v658, %v669
        %v676 = vsub.f32 %v659, %v672
        %v677 = vmul.f32 %v673, 1.442695
        %v678 = vpow.pop %v677
        %v679 = vmul.f32 %v674, 1.442695
        %v680 = vpow.pop %v679
        %v681 = vmul.f32 %v675, 1.442695
        %v682 = vpow.pop %v681
        %v683 = vmul.f32 %v676, 1.442695
        %v684 = vpow.pop %v683
        %v685 = vsel %vm660, %v678, 0.0
        %686 = vadd.xlane.f32.xlu0 %v685
        %v687 = vpop.xlane.xlu0 %686
        %v688 = vsel %vm660, %v680, 0.0
        %689 = vadd.xlane.f32.xlu0 %v688
        %v690 = vpop.xlane.xlu0 %689
        %v691 = vsel %vm660, %v682, 0.0
        %692 = vadd.xlane.f32.xlu0 %v691
        %v693 = vpop.xlane.xlu0 %692
        %v694 = vsel %vm660, %v684, 0.0
        %695 = vadd.xlane.f32.xlu0 %v694
        %v696 = vpop.xlane.xlu0 %695
        %v697 = vrcp.pop %v687
        %v698 = vrcp.pop %v690
        %v699 = vrcp.pop %v693
        %v700 = vrcp.pop %v696
        %v701 = vmul.f32 %v678, %v697
        %v702 = vmul.f32 %v680, %v698
        %v703 = vmul.f32 %v682, %v699
        %v704 = vmul.f32 %v684, %v700
        %p705 = scmp.eq.s32.totalorder %s40, 0
        // Predicated region
        $region61: #{tpu_custom_call.1} parent=51 // pred_check
          %p706 = pneg %p705
        $region62: #{tpu_custom_call.1} parent=51 // pred_check_branch
          %708 = sbr.rel (%p706) target = $region64
        $region63: #{tpu_custom_call.1} parent=51 // pred_region
          %709 = vst.msk [vmem:[#allocation2] sm:$0xff] %vm660, 0.0
          %710 = vst.msk [vmem:[#allocation2 + $0x8] sm:$0xff] %vm660, 0.0
          %711 = vst.msk [vmem:[#allocation2 + $0x10] sm:$0xff] %vm660, 0.0
          %712 = vst.msk [vmem:[#allocation2 + $0x18] sm:$0xff] %vm660, 0.0
        $region64: #{tpu_custom_call.1} parent=51 // pred_fallthru
          _
        %v713 = vld [vmem:[#allocation2] sm:$0xff]
        %v714 = vld [vmem:[#allocation2 + $0x8] sm:$0xff]
        %v715 = vld [vmem:[#allocation2 + $0x10] sm:$0xff]
        %v716 = vld [vmem:[#allocation2 + $0x18] sm:$0xff]
        %v717 = vadd.f32 %v713, %v701
        %v718 = vadd.f32 %v714, %v702
        %v719 = vadd.f32 %v715, %v703
        %v720 = vadd.f32 %v716, %v704
        %721 = vst.msk [vmem:[#allocation2] sm:$0xff] %vm660, %v717
        %722 = vst.msk [vmem:[#allocation2 + $0x8] sm:$0xff] %vm660, %v718
        %723 = vst.msk [vmem:[#allocation2 + $0x10] sm:$0xff] %vm660, %v719
        %724 = vst.msk [vmem:[#allocation2 + $0x18] sm:$0xff] %vm660, %v720
        %p725 = scmp.eq.s32.totalorder %s40, 1
        // Predicated region
        $region65: #{tpu_custom_call.1} parent=51 // pred_check
          %p726 = pneg %p725
        $region66: #{tpu_custom_call.1} parent=51 // pred_check_branch
          %728 = sbr.rel (%p726) target = $region68
        $region67: #{tpu_custom_call.1} parent=51 // pred_region
          %v729 = vld [vmem:[%s434] sm:$0xff]
          %v730 = vld [vmem:[%s532] sm:$0x1]
          %v732 = vsel %vm660, %v701, 0
          %v735 = vsel %vm660, %v702, 0
          %v738 = vsel %vm660, %v703, 0
          %v741 = vsel %vm660, %v704, 0
          %743 = vmatprep.subr.mxu0 0.0
          %744 = vmatpush1.msra.mxu0 %v729
          %745 = vmatprep.subr.mxu0 0.0
          %746 = vmatpush1.msra.mxu0 0.0
          %747 = vmatprep.subr.mxu0 0.0
          %748 = vmatpush1.msra.mxu0 0.0
          %749 = vmatprep.subr.mxu0 0.0
          %750 = vmatpush1.msra.mxu0 0.0
          %751 = vmatprep.subr.mxu0 0.0
          %752 = vmatpush1.msra.mxu0 0.0
          %753 = vmatprep.subr.mxu0 0.0
          %754 = vmatpush1.msra.mxu0 0.0
          %755 = vmatprep.subr.mxu0 0.0
          %756 = vmatpush1.msra.mxu0 0.0
          %757 = vmatprep.subr.mxu0 0.0
          %758 = vmatpush1.msra.mxu0 0.0
          %759 = vmatprep.subr.mxu0 0.0
          %760 = vmatpush1.msra.mxu0 0.0
          %761 = vmatprep.subr.mxu0 0.0
          %762 = vmatpush1.msra.mxu0 0.0
          %763 = vmatprep.subr.mxu0 0.0
          %764 = vmatpush1.msra.mxu0 0.0
          %765 = vmatprep.subr.mxu0 0.0
          %766 = vmatpush1.msra.mxu0 0.0
          %767 = vmatprep.subr.mxu0 0.0
          %768 = vmatpush1.msra.mxu0 0.0
          %769 = vmatprep.subr.mxu0 0.0
          %770 = vmatpush1.msra.mxu0 0.0
          %771 = vmatprep.subr.mxu0 0.0
          %772 = vmatpush1.msra.mxu0 0.0
          %773 = vmatprep.subr.mxu0 0.0
          %774 = vmatpush1.msra.mxu0 0.0
          %775 = vmatprep.subr.mxu0 0.0
          %776 = vmatpush1.msra.mxu0 0.0
          %777 = vmatprep.subr.mxu0 0.0
          %778 = vmatpush1.msra.mxu0 0.0
          %779 = vmatprep.subr.mxu0 0.0
          %780 = vmatpush1.msra.mxu0 0.0
          %781 = vmatprep.subr.mxu0 0.0
          %782 = vmatpush1.msra.mxu0 0.0
          %783 = vmatprep.subr.mxu0 0.0
          %784 = vmatpush1.msra.mxu0 0.0
          %785 = vmatprep.subr.mxu0 0.0
          %786 = vmatpush1.msra.mxu0 0.0
          %787 = vmatprep.subr.mxu0 0.0
          %788 = vmatpush1.msra.mxu0 0.0
          %789 = vmatprep.subr.mxu0 0.0
          %790 = vmatpush1.msra.mxu0 0.0
          %791 = vmatprep.subr.mxu0 0.0
          %792 = vmatpush1.msra.mxu0 0.0
          %793 = vmatprep.subr.mxu0 0.0
          %794 = vmatpush1.msra.mxu0 0.0
          %795 = vmatprep.subr.mxu0 0.0
          %796 = vmatpush1.msra.mxu0 0.0
          %797 = vmatprep.subr.mxu0 0.0
          %798 = vmatpush1.msra.mxu0 0.0
          %799 = vmatprep.subr.mxu0 0.0
          %800 = vmatpush1.msra.mxu0 0.0
          %801 = vmatprep.subr.mxu0 0.0
          %802 = vmatpush1.msra.mxu0 0.0
          %803 = vmatprep.subr.mxu0 0.0
          %804 = vmatpush1.msra.mxu0 0.0
          %805 = vmatprep.subr.mxu0 0.0
          %806 = vmatpush1.msra.mxu0 0.0
          %807 = vmatprep.mubr.f32.mxu0 0.0
          %808 = vmatmul.mubr.f32.gmra.mrb[0].mxu0 %v732
          %v809 = vpop.f32.mrb[0].mxu0
          %v810 = vadd.f32 0.0, %v809
          %v811 = vpop.f32.mrb[0].mxu0
          %812 = vmatprep.mubr.f32.mxu0 0.0
          %813 = vmatmul.mubr.f32.gmra.mrb[0].mxu0 %v735
          %v814 = vpop.f32.mrb[0].mxu0
          %v815 = vadd.f32 0.0, %v814
          %v816 = vpop.f32.mrb[0].mxu0
          %817 = vmatprep.mubr.f32.mxu0 0.0
          %818 = vmatmul.mubr.f32.gmra.mrb[0].mxu0 %v738
          %v819 = vpop.f32.mrb[0].mxu0
          %v820 = vadd.f32 0.0, %v819
          %v821 = vpop.f32.mrb[0].mxu0
          %822 = vmatprep.mubr.f32.mxu0 0.0
          %823 = vmatmul.mubr.f32.gmra.mrb[0].mxu0 %v741
          %v824 = vpop.f32.mrb[0].mxu0
          %v825 = vadd.f32 0.0, %v824
          %v826 = vpop.f32.mrb[0].mxu0
          %827 = vdwg.mxu0
          %v828 = vmul.f32 %v701, %v603
          %v829 = vmul.f32 %v702, %v607
          %v830 = vmul.f32 %v703, %v611
          %v831 = vmul.f32 %v704, %v615
          %v832 = vsel %vm660, %v828, 0.0
          %833 = vadd.xlane.f32.xlu0 %v832
          %v834 = vpop.xlane.xlu0 %833
          %v835 = vsel %vm660, %v829, 0.0
          %836 = vadd.xlane.f32.xlu0 %v835
          %v837 = vpop.xlane.xlu0 %836
          %v838 = vsel %vm660, %v830, 0.0
          %839 = vadd.xlane.f32.xlu0 %v838
          %v840 = vpop.xlane.xlu0 %839
          %v841 = vsel %vm660, %v831, 0.0
          %842 = vadd.xlane.f32.xlu0 %v841
          %v843 = vpop.xlane.xlu0 %842
          %v845 = vlaneseq
          %v846 = vshrl.u32 %v845, 7
          %v847 = vsub.s32 0, %v846
          %v848 = vrot.slane %v730, %v847
          %v850 = vmul.f32 %v834, %v848
          %v851 = vmul.f32 %v837, %v848
          %v852 = vmul.f32 %v840, %v848
          %v853 = vmul.f32 %v843, %v848
          %v854 = vadd.f32 %v810, %v850
          %v855 = vadd.f32 %v815, %v851
          %v856 = vadd.f32 %v820, %v852
          %v857 = vadd.f32 %v825, %v853
          %vm858 = vcmask 261120
          %v859 = vsel %vm858, %v854, 0.0
          %860 = vadd.xlane.f32.xlu0 %v859
          %v861 = vpop.xlane.xlu0 %860
          %v862 = vsel %vm858, %v855, 0.0
          %863 = vadd.xlane.f32.xlu0 %v862
          %v864 = vpop.xlane.xlu0 %863
          %v865 = vsel %vm858, %v856, 0.0
          %866 = vadd.xlane.f32.xlu0 %v865
          %v867 = vpop.xlane.xlu0 %866
          %v868 = vsel %vm858, %v857, 0.0
          %869 = vadd.xlane.f32.xlu0 %v868
          %v870 = vpop.xlane.xlu0 %869
          %v871 = vrcp.pop 32.0
          %v872 = vmul.f32 %v861, %v871
          %v873 = vmul.f32 %v864, %v871
          %v874 = vmul.f32 %v867, %v871
          %v875 = vmul.f32 %v870, %v871
          %v876 = vsub.f32 %v854, %v872
          %v877 = vsub.f32 %v855, %v873
          %v878 = vsub.f32 %v856, %v874
          %v879 = vsub.f32 %v857, %v875
          %v880 = vmul.f32 %v876, %v876
          %v881 = vmul.f32 %v877, %v877
          %v882 = vmul.f32 %v878, %v878
          %v883 = vmul.f32 %v879, %v879
          %v884 = vsel %vm858, %v880, 0.0
          %885 = vadd.xlane.f32.xlu0 %v884
          %v886 = vpop.xlane.xlu0 %885
          %v887 = vsel %vm858, %v881, 0.0
          %888 = vadd.xlane.f32.xlu0 %v887
          %v889 = vpop.xlane.xlu0 %888
          %v890 = vsel %vm858, %v882, 0.0
          %891 = vadd.xlane.f32.xlu0 %v890
          %v892 = vpop.xlane.xlu0 %891
          %v893 = vsel %vm858, %v883, 0.0
          %894 = vadd.xlane.f32.xlu0 %v893
          %v895 = vpop.xlane.xlu0 %894
          %v896 = vmul.f32 %v886, %v871
          %v897 = vmul.f32 %v889, %v871
          %v898 = vmul.f32 %v892, %v871
          %v899 = vmul.f32 %v895, %v871
          %v900 = vadd.f32 %v896, 1e-05
          %v901 = vadd.f32 %v897, 1e-05
          %v902 = vadd.f32 %v898, 1e-05
          %v903 = vadd.f32 %v899, 1e-05
          %v904 = vrsqrt.pop %v900
          %v905 = vrsqrt.pop %v901
          %v906 = vrsqrt.pop %v902
          %v907 = vrsqrt.pop %v903
          %v908 = vmul.f32 %v876, %v904
          %v909 = vmul.f32 %v877, %v905
          %v910 = vmul.f32 %v878, %v906
          %v911 = vmul.f32 %v879, %v907
          %v912 = vld [vmem:[%s6] sm:$0x1]
          %v914 = vlaneseq
          %v915 = vshrl.u32 %v914, 7
          %v916 = vsub.s32 0, %v915
          %v917 = vrot.slane %v912, %v916
          %v919 = vmul.f32 %v908, %v917
          %v920 = vmul.f32 %v909, %v917
          %v921 = vmul.f32 %v910, %v917
          %v922 = vmul.f32 %v911, %v917
          %v923 = vld [vmem:[%s7] sm:$0x1]
          %v925 = vlaneseq
          %v926 = vshrl.u32 %v925, 7
          %v927 = vsub.s32 0, %v926
          %v928 = vrot.slane %v923, %v927
          %v930 = vadd.f32 %v919, %v928
          %v931 = vadd.f32 %v920, %v928
          %v932 = vadd.f32 %v921, %v928
          %v933 = vadd.f32 %v922, %v928
          %v934 = vcombine.low %v930, %v932
          %v935 = vcombine.high %v930, %v932
          %v937 = vunpack.c.l.s4 1983009808
          %v938 = vunpack.c.0.s8 %v937
          %v939 = vlaneseq
          %v940 = vshrl.u32 %v939, 7
          %v941 = vsub.s32 %v938, %v940
          %v942 = vrot.slane %v934, %v941
          %v944 = vunpack.c.l.s4 1983009808
          %v945 = vunpack.c.0.s8 %v944
          %v946 = vlaneseq
          %v947 = vshrl.u32 %v946, 7
          %v948 = vsub.s32 %v945, %v947
          %v949 = vrot.slane %v935, %v948
          %v950 = vcombine.low %v931, %v933
          %v951 = vcombine.high %v931, %v933
          %v953 = vunpack.c.l.s4 1983009808
          %v954 = vunpack.c.0.s8 %v953
          %v955 = vlaneseq
          %v956 = vshrl.u32 %v955, 7
          %v957 = vsub.s32 %v954, %v956
          %v958 = vrot.slane %v950, %v957
          %v960 = vunpack.c.l.s4 1983009808
          %v961 = vunpack.c.0.s8 %v960
          %v962 = vlaneseq
          %v963 = vshrl.u32 %v962, 7
          %v964 = vsub.s32 %v961, %v963
          %v965 = vrot.slane %v951, %v964
          %v966 = vcombine.low %v942, %v958
          %v967 = vcombine.high %v942, %v958
          %v969 = vunpack.c.l.s4 1934713408
          %v970 = vunpack.c.0.s8 %v969
          %v971 = vlaneseq
          %v972 = vshrl.u32 %v971, 7
          %v973 = vsub.s32 %v970, %v972
          %v974 = vrot.slane %v966, %v973
          %v976 = vunpack.c.l.s4 1934713408
          %v977 = vunpack.c.0.s8 %v976
          %v978 = vlaneseq
          %v979 = vshrl.u32 %v978, 7
          %v980 = vsub.s32 %v977, %v979
          %v981 = vrot.slane %v967, %v980
          %v982 = vcombine.low %v949, %v965
          %v983 = vcombine.high %v949, %v965
          %v985 = vunpack.c.l.s4 1934713408
          %v986 = vunpack.c.0.s8 %v985
          %v987 = vlaneseq
          %v988 = vshrl.u32 %v987, 7
          %v989 = vsub.s32 %v986, %v988
          %v990 = vrot.slane %v982, %v989
          %v992 = vunpack.c.l.s4 1934713408
          %v993 = vunpack.c.0.s8 %v992
          %v994 = vlaneseq
          %v995 = vshrl.u32 %v994, 7
          %v996 = vsub.s32 %v993, %v995
          %v997 = vrot.slane %v983, %v996
          %v998 = vcombine.high %v974, 0.0
          %v999 = vcombine.high %v981, 0.0
          %v1000 = vcombine.high %v990, 0.0
          %v1001 = vcombine.high %v997, 0.0
          %1003 = vrot.lane.b32.xlu0 %v998, 32
          %v1004 = vpop.permute.xlu0 %1003
          %1007 = vrot.lane.b32.xlu0 %v981, 64
          %v1008 = vpop.permute.xlu0 %1007
          %1011 = vrot.lane.b32.xlu0 %v999, 96
          %v1012 = vpop.permute.xlu0 %1011
          %1015 = vrot.lane.b32.xlu0 %v1000, 32
          %v1016 = vpop.permute.xlu0 %1015
          %1019 = vrot.lane.b32.xlu0 %v997, 64
          %v1020 = vpop.permute.xlu0 %1019
          %1023 = vrot.lane.b32.xlu0 %v1001, 96
          %v1024 = vpop.permute.xlu0 %1023
          %v1026 = vsel %vm858, %v974, %v1004
          %vm1027 = vcmask 523264
          %v1028 = vsel %vm1027, %v1026, %v1008
          %vm1029 = vcmask 785408
          %v1030 = vsel %vm1029, %v1028, %v1012
          %v1031 = vsel %vm858, %v990, %v1016
          %v1032 = vsel %vm1027, %v1031, %v1020
          %v1033 = vsel %vm1029, %v1032, %v1024
          %v1036 = vcombine.low %v1030, %v1033
          %1038 = vst [vmem:[%s498] sm:$0xff] %v1036
          %v1039 = vld [vmem:[#allocation2] sm:$0xff]
          %v1040 = vld [vmem:[#allocation2 + $0x8] sm:$0xff]
          %v1041 = vld [vmem:[#allocation2 + $0x10] sm:$0xff]
          %v1042 = vld [vmem:[#allocation2 + $0x18] sm:$0xff]
          %v1043 = vmul.f32 %v1039, 0.5
          %v1044 = vmul.f32 %v1040, 0.5
          %v1045 = vmul.f32 %v1041, 0.5
          %v1046 = vmul.f32 %v1042, 0.5
          %v1047 = vcombine.low %v1043, %v1045
          %v1048 = vcombine.high %v1043, %v1045
          %v1050 = vunpack.c.l.s4 1983009808
          %v1051 = vunpack.c.0.s8 %v1050
          %v1052 = vlaneseq
          %v1053 = vshrl.u32 %v1052, 7
          %v1054 = vsub.s32 %v1051, %v1053
          %v1055 = vrot.slane %v1047, %v1054
          %v1057 = vunpack.c.l.s4 1983009808
          %v1058 = vunpack.c.0.s8 %v1057
          %v1059 = vlaneseq
          %v1060 = vshrl.u32 %v1059, 7
          %v1061 = vsub.s32 %v1058, %v1060
          %v1062 = vrot.slane %v1048, %v1061
          %v1063 = vcombine.low %v1044, %v1046
          %v1064 = vcombine.high %v1044, %v1046
          %v1066 = vunpack.c.l.s4 1983009808
          %v1067 = vunpack.c.0.s8 %v1066
          %v1068 = vlaneseq
          %v1069 = vshrl.u32 %v1068, 7
          %v1070 = vsub.s32 %v1067, %v1069
          %v1071 = vrot.slane %v1063, %v1070
          %v1073 = vunpack.c.l.s4 1983009808
          %v1074 = vunpack.c.0.s8 %v1073
          %v1075 = vlaneseq
          %v1076 = vshrl.u32 %v1075, 7
          %v1077 = vsub.s32 %v1074, %v1076
          %v1078 = vrot.slane %v1064, %v1077
          %v1079 = vcombine.low %v1055, %v1071
          %v1080 = vcombine.high %v1055, %v1071
          %v1082 = vunpack.c.l.s4 1934713408
          %v1083 = vunpack.c.0.s8 %v1082
          %v1084 = vlaneseq
          %v1085 = vshrl.u32 %v1084, 7
          %v1086 = vsub.s32 %v1083, %v1085
          %v1087 = vrot.slane %v1079, %v1086
          %v1089 = vunpack.c.l.s4 1934713408
          %v1090 = vunpack.c.0.s8 %v1089
          %v1091 = vlaneseq
          %v1092 = vshrl.u32 %v1091, 7
          %v1093 = vsub.s32 %v1090, %v1092
          %v1094 = vrot.slane %v1080, %v1093
          %v1095 = vcombine.low %v1062, %v1078
          %v1096 = vcombine.high %v1062, %v1078
          %v1098 = vunpack.c.l.s4 1934713408
          %v1099 = vunpack.c.0.s8 %v1098
          %v1100 = vlaneseq
          %v1101 = vshrl.u32 %v1100, 7
          %v1102 = vsub.s32 %v1099, %v1101
          %v1103 = vrot.slane %v1095, %v1102
          %v1105 = vunpack.c.l.s4 1934713408
          %v1106 = vunpack.c.0.s8 %v1105
          %v1107 = vlaneseq
          %v1108 = vshrl.u32 %v1107, 7
          %v1109 = vsub.s32 %v1106, %v1108
          %v1110 = vrot.slane %v1096, %v1109
          %v1111 = vcombine.high %v1087, 0.0
          %v1112 = vcombine.high %v1094, 0.0
          %v1113 = vcombine.high %v1103, 0.0
          %v1114 = vcombine.high %v1110, 0.0
          %1116 = vrot.lane.b32.xlu0 %v1111, 8
          %v1117 = vpop.permute.xlu0 %1116
          %1120 = vrot.lane.b32.xlu0 %v1094, 16
          %v1121 = vpop.permute.xlu0 %1120
          %1124 = vrot.lane.b32.xlu0 %v1112, 24
          %v1125 = vpop.permute.xlu0 %1124
          %1128 = vrot.lane.b32.xlu0 %v1103, 32
          %v1129 = vpop.permute.xlu0 %1128
          %1132 = vrot.lane.b32.xlu0 %v1113, 40
          %v1133 = vpop.permute.xlu0 %1132
          %1136 = vrot.lane.b32.xlu0 %v1110, 48
          %v1137 = vpop.permute.xlu0 %1136
          %1140 = vrot.lane.b32.xlu0 %v1114, 56
          %v1141 = vpop.permute.xlu0 %1140
          %v1143 = vsel %vm660, %v1087, %v1117
          %vm1144 = vcmask 130048
          %v1145 = vsel %vm1144, %v1143, %v1121
          %vm1146 = vcmask 195584
          %v1147 = vsel %vm1146, %v1145, %v1125
          %v1148 = vsel %vm858, %v1147, %v1129
          %vm1149 = vcmask 326656
          %v1150 = vsel %vm1149, %v1148, %v1133
          %vm1151 = vcmask 392192
          %v1152 = vsel %vm1151, %v1150, %v1137
          %vm1153 = vcmask 457728
          %v1154 = vsel %vm1153, %v1152, %v1141
          %vm1155 = vcmask 519168
          %1156 = vst.msk [vmem:[%s505] sm:$0xf] %vm1155, %v1154
        $region68: #{tpu_custom_call.1} parent=51 // pred_fallthru
          _
        %s1157 = sand.u32 %s270, 1
        %s1158 = scalar_lea.sflag [#allocation5], %s1157
        %s1159 = sand.u32 %s270, 1
        %s1160 = smul.addr %s1159, 8
        %s1161 = scalar_lea.vmem [#allocation8], %s1160
        %s1162 = sand.u32 %s298, 1
        %s1163 = scalar_lea.sflag [#allocation10], %s1162
        %s1164 = sand.u32 %s298, 1
        %s1165 = smul.addr %s1164, 4
        %s1166 = scalar_lea.vmem [#allocation9], %s1165
        // Predicated region
        $region69: #{tpu_custom_call.1} parent=51 // pred_check
          %p1167 = pneg %p280
        $region70: #{tpu_custom_call.1} parent=51 // pred_check_branch
          %1169 = sbr.rel (%p1167) target = $region72
        $region71: #{tpu_custom_call.1} parent=51 // pred_region
          %s1171 = ssub.s32 128, 128
          %1172 = vsyncadd %s1158, %s1171
          %s1173 = smul.addr %s39, 2
          %s1174 = smul.addr %s38, 2
          %s1175 = sadd.s32 %s1173, %s1174
          %s1176 = smul.addr %s1175, 64
          %s1177 = scalar_lea.hbm %s8, %s1176
          %s1179 = sshll.u32 %s1161, 4
          %s1180 = int_to_ptr.vmem [resolvable:$true] %s1179
          %1182 = dma.vmem_to_hbm [thread:$0]  %s1180, 128, %s1177, %s1158
        $region72: #{tpu_custom_call.1} parent=51 // pred_fallthru
          _
        // Predicated region
        $region73: #{tpu_custom_call.1} parent=51 // pred_check
          %p1183 = pneg %p308
        $region74: #{tpu_custom_call.1} parent=51 // pred_check_branch
          %1185 = sbr.rel (%p1183) target = $region76
        $region75: #{tpu_custom_call.1} parent=51 // pred_region
          %s1187 = ssub.s32 64, 64
          %1188 = vsyncadd %s1163, %s1187
          %s1189 = sadd.s32 %s39, %s38
          %s1190 = smul.addr %s1189, 64
          %s1191 = scalar_lea.hbm %s9, %s1190
          %s1193 = sshll.u32 %s1166, 4
          %s1194 = int_to_ptr.vmem [resolvable:$true] %s1193
          %1196 = dma.vmem_to_hbm [thread:$0]  %s1194, 64, %s1191, %s1163
        $region76: #{tpu_custom_call.1} parent=51 // pred_fallthru
          _
      $region52: #{tpu_custom_call.1} parent=5 // pred_fallthru
        _
      %p1197 = scmp.le.s32.totalorder 2, %s28
      // Predicated region
      $region77: #{tpu_custom_call.1} parent=5 // pred_check
        %p1198 = pneg %p1197
      $region78: #{tpu_custom_call.1} parent=5 // pred_check_branch
        %1200 = sbr.rel (%p1198) target = $region80
      $region79: #{tpu_custom_call.1} parent=5 // pred_region
        %s1201 = ssub.s32 %s28, 2
        // Predicated region
        $region81: #{tpu_custom_call.1} parent=79 // pred_check
          %p1202 = pneg %p286
        $region82: #{tpu_custom_call.1} parent=79 // pred_check_branch
          %1204 = sbr.rel (%p1202) target = $region84
        $region83: #{tpu_custom_call.1} parent=79 // pred_region
          %s1205 = sand.u32 %s271, 1
          %s1206 = scalar_lea.sflag [#allocation5], %s1205
          %s1207 = sand.u32 %s271, 1
          %s1208 = smul.addr %s1207, 8
          %s1209 = scalar_lea.vmem [#allocation8], %s1208
          %1210 = dma.done %s1206, 128
        $region84: #{tpu_custom_call.1} parent=79 // pred_fallthru
          _
        // Predicated region
        $region85: #{tpu_custom_call.1} parent=79 // pred_check
          %p1211 = pneg %p314
        $region86: #{tpu_custom_call.1} parent=79 // pred_check_branch
          %1213 = sbr.rel (%p1211) target = $region88
        $region87: #{tpu_custom_call.1} parent=79 // pred_region
          %s1214 = sand.u32 %s299, 1
          %s1215 = scalar_lea.sflag [#allocation10], %s1214
          %s1216 = sand.u32 %s299, 1
          %s1217 = smul.addr %s1216, 4
          %s1218 = scalar_lea.vmem [#allocation9], %s1217
          %1219 = dma.done %s1215, 64
        $region88: #{tpu_custom_call.1} parent=79 // pred_fallthru
          _
      $region80: #{tpu_custom_call.1} parent=5 // pred_fallthru
        _
    $region6: #{tpu_custom_call.1} parent=1 // loop_footer
      %s32 = sadd.s32 1, %s28
    $region7: #{tpu_custom_call.1} parent=1 // loop_footer_branch
      %27 = sbr.rel target = $region3
    $region8: #{tpu_custom_call.1} parent=1 // loop_exit
      _
    %1220 = vsyncpa [#allocation4], 1
    %s1221 = scalar_lea.sflag [#allocation4], 1
    %1222 = vsyncpa %s1221, 1
    %1223 = vsyncpa [#allocation7], 1
    %s1224 = scalar_lea.sflag [#allocation7], 1
    %1225 = vsyncpa %s1224, 1
    %1226 = vsyncpa [#allocation5], 1
    %s1227 = scalar_lea.sflag [#allocation5], 1
    %1228 = vsyncpa %s1227, 1
    %1229 = vsyncpa [#allocation10], 1
    %s1230 = scalar_lea.sflag [#allocation10], 1
    %1231 = vsyncpa %s1230, 1

</llo_original>
